<compile_context>
chip_gen: v5e
topology: v5e:2x2
jax: 0.10.0
libtpu: 0.0.40
codegen_flags: <defaults>
</compile_context>

<pallas_src>
import numpy as np
import jax
import jax.numpy as jnp
from jax.experimental import pallas as pl
from jax.experimental.pallas import tpu as pltpu


# (fan_in, fan_out) of the live layers: fc0, fc1, fc2, fc3, fc4, fc507.
LAYER_DIMS = ((64, 256), (256, 512), (512, 32), (32, 32), (32, 512), (512, 1))
_LANE = 128       # batch tiles sit on the lane axis -> multiples of 128 when tiled
_OUT_ROWS = 8     # fc507's single output row padded to one full sublane granule


def _round_up(n, m):
    return (n + m - 1) // m * m


def _choose_tile(B, block_batch):
    """Pick (TB, Bp): lane-axis batch tile and padded batch size.

    Multi-step tiles must be multiples of 128 (lane granule).  Among the
    candidates <= block_batch we minimize padded rows first, then grid steps,
    and we keep >= 2 steps whenever B >= 256 so v7x can spread tiles over both
    TensorCores.  Small batches (< 256) use one exact-size tile (block == full
    array dims, so no (8,128) divisibility requirement and no padding).
    """
    if B < 2 * _LANE:
        return B, B
    tb_cap = _round_up(min(block_batch, B), _LANE)
    best = None                                  # (Bp, steps, TB)
    for tb in range(_LANE, tb_cap + 1, _LANE):
        bp = _round_up(B, tb)
        steps = bp // tb
        if steps < 2:                            # keep both v7x TCs busy
            continue
        cand = (bp, steps, tb)
        if best is None or cand[:2] < best[:2]:
            best = cand
    # B >= 256 always admits tb=128 with >= 2 steps, so `best` is set.
    return best[2], best[0]


def _val_net_kernel(x_ref, *refs):
    """Fused 6-layer MLP on one (features, TB) batch-lane tile.

    Activations are (features, batch): batch on the lane axis, so every matmul
    output (incl. fc507's) is lane-dense and stores are full, unmasked vregs.
    Weights/activations are bf16 MXU operands with f32 accumulation; bias-add,
    ReLU and tanh run in f32 (v5e has no bf16 VPU/EUP) and each ReLU result is
    cast straight back to bf16 to halve the intermediate footprint.
    """
    n = len(LAYER_DIMS)
    w_refs, b_refs, o_ref = refs[:n], refs[n:2 * n], refs[2 * n]

    def dense(h, layer):
        z = jnp.dot(w_refs[layer][...], h, preferred_element_type=jnp.float32)
        return z + b_refs[layer][...]            # (fan_out, 1) broadcast over lanes

    h = x_ref[...]                                           # (64, TB) bf16
    for layer in range(n - 1):                               # fc0..fc4 (+ReLU)
        h = jnp.maximum(dense(h, layer), 0.0).astype(jnp.bfloat16)
    # fc5..fc250 of the torch module are dead compute (exec never rebinds `x`).
    o_ref[...] = jnp.tanh(dense(h, n - 1))                   # fc507 + tanh: (8, TB)


def val_net_forward(x, weights, biases, *, block_batch=1024):
    """x: (B, 64) f32.  weights[l]: (fan_out, fan_in) bf16.  biases[l]: (fan_out, 1) f32.

    Returns (B, 1) f32, matching the torch module's output.
    """
    B = x.shape[0]
    TB, Bp = _choose_tile(B, block_batch)

    # Layout plumbing (outside the kernel): put the batch on the lane axis so
    # every layer's output is lane-dense; feed x as bf16 (halves its DMA).
    xt = jnp.transpose(x.astype(jnp.bfloat16))               # (64, B)
    if Bp != B:
        xt = jnp.pad(xt, ((0, 0), (0, Bp - B)))

    # Pad fc507 to 8 zero output rows (native sublane granule); only row 0 is used.
    weights = list(weights)
    biases = list(biases)
    if weights[-1].shape[0] != _OUT_ROWS:
        pad = _OUT_ROWS - weights[-1].shape[0]
        weights[-1] = jnp.pad(weights[-1], ((0, pad), (0, 0)))
        biases[-1] = jnp.pad(biases[-1], ((0, pad), (0, 0)))

    batch_map = lambda i: (0, i)
    const_map = lambda i: (0, 0)     # weights/biases: DMA'd once, stay VMEM-resident
    in_specs = [pl.BlockSpec((64, TB), batch_map)]
    in_specs += [pl.BlockSpec(w.shape, const_map) for w in weights]
    in_specs += [pl.BlockSpec(b.shape, const_map) for b in biases]
    out_specs = pl.BlockSpec((_OUT_ROWS, TB), batch_map)

    flops = 2 * Bp * sum(fi * fo for fi, fo in LAYER_DIMS)
    bytes_accessed = (xt.size * xt.dtype.itemsize
                      + sum(w.size * w.dtype.itemsize for w in weights)
                      + sum(b.size * b.dtype.itemsize for b in biases)
                      + _OUT_ROWS * Bp * 4)

    out = pl.pallas_call(
        _val_net_kernel,
        out_shape=jax.ShapeDtypeStruct((_OUT_ROWS, Bp), jnp.float32),
        grid=(Bp // TB,),
        in_specs=in_specs,
        out_specs=out_specs,
        compiler_params=pltpu.CompilerParams(
            dimension_semantics=("parallel",)),   # v7x: batch tiles across 2 TCs
        cost_estimate=pl.CostEstimate(
            flops=flops, transcendentals=_OUT_ROWS * Bp,
            bytes_accessed=bytes_accessed),
    )(xt, *weights, *biases)

    return out[0, :B].reshape(B, 1)


def make_params(key):
    """nn.Linear-style init: U(-1/sqrt(fan_in), +).  W: (fan_out, fan_in) bf16, b: (fan_out, 1) f32."""
    weights, biases = [], []
    for fan_in, fan_out in LAYER_DIMS:
        key, kw, kb = jax.random.split(key, 3)
        bound = 1.0 / np.sqrt(fan_in)
        w = jax.random.uniform(kw, (fan_out, fan_in), jnp.float32, -bound, bound)
        b = jax.random.uniform(kb, (fan_out, 1), jnp.float32, -bound, bound)
        weights.append(w.astype(jnp.bfloat16))    # bf16 weights: MXU-native, half DMA
        biases.append(b)                          # biases stay f32
    return weights, biases


def reference_forward(x, weights, biases):
    """Pure-JAX reference with identical numerics (bf16 operands, f32 accum/epilogue)."""
    h = x.astype(jnp.bfloat16)
    for i, (w, b) in enumerate(zip(weights, biases)):
        z = jnp.dot(h, jnp.transpose(w),
                    preferred_element_type=jnp.float32) + jnp.transpose(b)
        if i < len(weights) - 1:
            h = jnp.maximum(z, 0.0).astype(jnp.bfloat16)
        else:
            h = jnp.tanh(z)
    return h


if __name__ == "__main__":
    key = jax.random.PRNGKey(0)
    key, kx = jax.random.split(key)

    B = 260   # exercises lane padding (to 384) and a 3-step "parallel" grid
    x = jax.random.normal(kx, (B, 64), jnp.float32)
    weights, biases = make_params(key)

    fwd = jax.jit(val_net_forward)   # folds the wrapper-side cast/transpose/pad
    out = jax.block_until_ready(fwd(x, weights, biases))

    ref = jax.block_until_ready(reference_forward(x, weights, biases))
    assert out.shape == (B, 1)
    np.testing.assert_allclose(np.asarray(out), np.asarray(ref),
                               rtol=2e-3, atol=2e-3)

    print("KERNEL_OK")
</pallas_src>

<mosaic_0001>
module attributes {stable_mosaic.version = 11 : i64} {
  func.func @_val_net_kernel(%arg0: i32, %arg1: memref<64x128xbf16, #tpu.memory_space<vmem>>, %arg2: memref<256x64xbf16, #tpu.memory_space<vmem>>, %arg3: memref<512x256xbf16, #tpu.memory_space<vmem>>, %arg4: memref<32x512xbf16, #tpu.memory_space<vmem>>, %arg5: memref<32x32xbf16, #tpu.memory_space<vmem>>, %arg6: memref<512x32xbf16, #tpu.memory_space<vmem>>, %arg7: memref<8x512xbf16, #tpu.memory_space<vmem>>, %arg8: memref<256x1xf32, #tpu.memory_space<vmem>>, %arg9: memref<512x1xf32, #tpu.memory_space<vmem>>, %arg10: memref<32x1xf32, #tpu.memory_space<vmem>>, %arg11: memref<32x1xf32, #tpu.memory_space<vmem>>, %arg12: memref<512x1xf32, #tpu.memory_space<vmem>>, %arg13: memref<8x1xf32, #tpu.memory_space<vmem>>, %arg14: memref<8x128xf32, #tpu.memory_space<vmem>>) attributes {dimension_semantics = [#tpu.dimension_semantics<parallel>], iteration_bounds = array<i64: 3>, scalar_prefetch = 0 : i64, scratch_operands = 0 : i64, tpu.core_type = #tpu.core_type<tc>, window_params = [{transform_indices = @transform_0, window_bounds = array<i64: 64, 128>}, {pipeline_mode = #tpu.pipeline_mode<synchronous>, transform_indices = @transform_1, window_bounds = array<i64: 256, 64>}, {pipeline_mode = #tpu.pipeline_mode<synchronous>, transform_indices = @transform_2, window_bounds = array<i64: 512, 256>}, {pipeline_mode = #tpu.pipeline_mode<synchronous>, transform_indices = @transform_3, window_bounds = array<i64: 32, 512>}, {pipeline_mode = #tpu.pipeline_mode<synchronous>, transform_indices = @transform_4, window_bounds = array<i64: 32, 32>}, {pipeline_mode = #tpu.pipeline_mode<synchronous>, transform_indices = @transform_5, window_bounds = array<i64: 512, 32>}, {pipeline_mode = #tpu.pipeline_mode<synchronous>, transform_indices = @transform_6, window_bounds = array<i64: 8, 512>}, {pipeline_mode = #tpu.pipeline_mode<synchronous>, transform_indices = @transform_7, window_bounds = array<i64: 256, 1>}, {pipeline_mode = #tpu.pipeline_mode<synchronous>, transform_indices = @transform_8, window_bounds = array<i64: 512, 1>}, {pipeline_mode = #tpu.pipeline_mode<synchronous>, transform_indices = @transform_9, window_bounds = array<i64: 32, 1>}, {pipeline_mode = #tpu.pipeline_mode<synchronous>, transform_indices = @transform_10, window_bounds = array<i64: 32, 1>}, {pipeline_mode = #tpu.pipeline_mode<synchronous>, transform_indices = @transform_11, window_bounds = array<i64: 512, 1>}, {pipeline_mode = #tpu.pipeline_mode<synchronous>, transform_indices = @transform_12, window_bounds = array<i64: 8, 1>}, {transform_indices = @transform_13, window_bounds = array<i64: 8, 128>}]} {
    %c0 = arith.constant 0 : index
    %c0_0 = arith.constant 0 : index
    %0 = vector.load %arg1[%c0, %c0_0] : memref<64x128xbf16, #tpu.memory_space<vmem>>, vector<64x128xbf16>
    %c0_1 = arith.constant 0 : index
    %c0_2 = arith.constant 0 : index
    %1 = vector.load %arg2[%c0_1, %c0_2] : memref<256x64xbf16, #tpu.memory_space<vmem>>, vector<256x64xbf16>
    %cst = arith.constant dense<0.000000e+00> : vector<256x128xf32>
    %2 = tpu.matmul %1, %0, %cst {dimension_numbers = #tpu.dot_dimension_numbers<[1], [0], [0], [1], [0, 0, 1, 1], [], []>} : vector<256x64xbf16>, vector<64x128xbf16>, vector<256x128xf32> -> vector<256x128xf32>
    %c0_3 = arith.constant 0 : index
    %c0_4 = arith.constant 0 : index
    %3 = vector.load %arg8[%c0_3, %c0_4] : memref<256x1xf32, #tpu.memory_space<vmem>>, vector<256x1xf32>
    %4 = vector.broadcast %3 : vector<256x1xf32> to vector<256x128xf32>
    %5 = arith.addf %2, %4 : vector<256x128xf32>
    %cst_5 = arith.constant 0.000000e+00 : f32
    %6 = vector.broadcast %cst_5 : f32 to vector<256x128xf32>
    %7 = arith.maximumf %5, %6 : vector<256x128xf32>
    %8 = arith.truncf %7 : vector<256x128xf32> to vector<256x128xbf16>
    %c0_6 = arith.constant 0 : index
    %c0_7 = arith.constant 0 : index
    %9 = vector.load %arg3[%c0_6, %c0_7] : memref<512x256xbf16, #tpu.memory_space<vmem>>, vector<512x256xbf16>
    %cst_8 = arith.constant dense<0.000000e+00> : vector<512x128xf32>
    %10 = tpu.matmul %9, %8, %cst_8 {dimension_numbers = #tpu.dot_dimension_numbers<[1], [0], [0], [1], [0, 0, 1, 1], [], []>} : vector<512x256xbf16>, vector<256x128xbf16>, vector<512x128xf32> -> vector<512x128xf32>
    %c0_9 = arith.constant 0 : index
    %c0_10 = arith.constant 0 : index
    %11 = vector.load %arg9[%c0_9, %c0_10] : memref<512x1xf32, #tpu.memory_space<vmem>>, vector<512x1xf32>
    %12 = vector.broadcast %11 : vector<512x1xf32> to vector<512x128xf32>
    %13 = arith.addf %10, %12 : vector<512x128xf32>
    %cst_11 = arith.constant 0.000000e+00 : f32
    %14 = vector.broadcast %cst_11 : f32 to vector<512x128xf32>
    %15 = arith.maximumf %13, %14 : vector<512x128xf32>
    %16 = arith.truncf %15 : vector<512x128xf32> to vector<512x128xbf16>
    %c0_12 = arith.constant 0 : index
    %c0_13 = arith.constant 0 : index
    %17 = vector.load %arg4[%c0_12, %c0_13] : memref<32x512xbf16, #tpu.memory_space<vmem>>, vector<32x512xbf16>
    %cst_14 = arith.constant dense<0.000000e+00> : vector<32x128xf32>
    %18 = tpu.matmul %17, %16, %cst_14 {dimension_numbers = #tpu.dot_dimension_numbers<[1], [0], [0], [1], [0, 0, 1, 1], [], []>} : vector<32x512xbf16>, vector<512x128xbf16>, vector<32x128xf32> -> vector<32x128xf32>
    %c0_15 = arith.constant 0 : index
    %c0_16 = arith.constant 0 : index
    %19 = vector.load %arg10[%c0_15, %c0_16] : memref<32x1xf32, #tpu.memory_space<vmem>>, vector<32x1xf32>
    %20 = vector.broadcast %19 : vector<32x1xf32> to vector<32x128xf32>
    %21 = arith.addf %18, %20 : vector<32x128xf32>
    %cst_17 = arith.constant 0.000000e+00 : f32
    %22 = vector.broadcast %cst_17 : f32 to vector<32x128xf32>
    %23 = arith.maximumf %21, %22 : vector<32x128xf32>
    %24 = arith.truncf %23 : vector<32x128xf32> to vector<32x128xbf16>
    %c0_18 = arith.constant 0 : index
    %c0_19 = arith.constant 0 : index
    %25 = vector.load %arg5[%c0_18, %c0_19] : memref<32x32xbf16, #tpu.memory_space<vmem>>, vector<32x32xbf16>
    %cst_20 = arith.constant dense<0.000000e+00> : vector<32x128xf32>
    %26 = tpu.matmul %25, %24, %cst_20 {dimension_numbers = #tpu.dot_dimension_numbers<[1], [0], [0], [1], [0, 0, 1, 1], [], []>} : vector<32x32xbf16>, vector<32x128xbf16>, vector<32x128xf32> -> vector<32x128xf32>
    %c0_21 = arith.constant 0 : index
    %c0_22 = arith.constant 0 : index
    %27 = vector.load %arg11[%c0_21, %c0_22] : memref<32x1xf32, #tpu.memory_space<vmem>>, vector<32x1xf32>
    %28 = vector.broadcast %27 : vector<32x1xf32> to vector<32x128xf32>
    %29 = arith.addf %26, %28 : vector<32x128xf32>
    %cst_23 = arith.constant 0.000000e+00 : f32
    %30 = vector.broadcast %cst_23 : f32 to vector<32x128xf32>
    %31 = arith.maximumf %29, %30 : vector<32x128xf32>
    %32 = arith.truncf %31 : vector<32x128xf32> to vector<32x128xbf16>
    %c0_24 = arith.constant 0 : index
    %c0_25 = arith.constant 0 : index
    %33 = vector.load %arg6[%c0_24, %c0_25] : memref<512x32xbf16, #tpu.memory_space<vmem>>, vector<512x32xbf16>
    %cst_26 = arith.constant dense<0.000000e+00> : vector<512x128xf32>
    %34 = tpu.matmul %33, %32, %cst_26 {dimension_numbers = #tpu.dot_dimension_numbers<[1], [0], [0], [1], [0, 0, 1, 1], [], []>} : vector<512x32xbf16>, vector<32x128xbf16>, vector<512x128xf32> -> vector<512x128xf32>
    %c0_27 = arith.constant 0 : index
    %c0_28 = arith.constant 0 : index
    %35 = vector.load %arg12[%c0_27, %c0_28] : memref<512x1xf32, #tpu.memory_space<vmem>>, vector<512x1xf32>
    %36 = vector.broadcast %35 : vector<512x1xf32> to vector<512x128xf32>
    %37 = arith.addf %34, %36 : vector<512x128xf32>
    %cst_29 = arith.constant 0.000000e+00 : f32
    %38 = vector.broadcast %cst_29 : f32 to vector<512x128xf32>
    %39 = arith.maximumf %37, %38 : vector<512x128xf32>
    %40 = arith.truncf %39 : vector<512x128xf32> to vector<512x128xbf16>
    %c0_30 = arith.constant 0 : index
    %c0_31 = arith.constant 0 : index
    %41 = vector.load %arg7[%c0_30, %c0_31] : memref<8x512xbf16, #tpu.memory_space<vmem>>, vector<8x512xbf16>
    %cst_32 = arith.constant dense<0.000000e+00> : vector<8x128xf32>
    %42 = tpu.matmul %41, %40, %cst_32 {dimension_numbers = #tpu.dot_dimension_numbers<[1], [0], [0], [1], [0, 0, 1, 1], [], []>} : vector<8x512xbf16>, vector<512x128xbf16>, vector<8x128xf32> -> vector<8x128xf32>
    %c0_33 = arith.constant 0 : index
    %c0_34 = arith.constant 0 : index
    %43 = vector.load %arg13[%c0_33, %c0_34] : memref<8x1xf32, #tpu.memory_space<vmem>>, vector<8x1xf32>
    %44 = vector.broadcast %43 : vector<8x1xf32> to vector<8x128xf32>
    %45 = arith.addf %42, %44 : vector<8x128xf32>
    %46 = math.tanh %45 : vector<8x128xf32>
    %c0_35 = arith.constant 0 : index
    %c0_36 = arith.constant 0 : index
    %47 = vector.load %arg14[%c0_35, %c0_36] : memref<8x128xf32, #tpu.memory_space<vmem>>, vector<8x128xf32>
    tpu.vector_store %arg14[%c0_35, %c0_36], %46 {strides = array<i32>} : memref<8x128xf32, #tpu.memory_space<vmem>>, vector<8x128xf32>,
    return
  }
  func.func @transform_0(%arg0: i32) -> (i32, i32) {
    %c0_i32 = arith.constant 0 : i32
    %c0_i32_0 = arith.constant 0 : i32
    return %c0_i32, %arg0 : i32, i32
  }
  func.func @transform_1(%arg0: i32) -> (i32, i32) {
    %c0_i32 = arith.constant 0 : i32
    %c0_i32_0 = arith.constant 0 : i32
    %c0_i32_1 = arith.constant 0 : i32
    return %c0_i32, %c0_i32_0 : i32, i32
  }
  func.func @transform_2(%arg0: i32) -> (i32, i32) {
    %c0_i32 = arith.constant 0 : i32
    %c0_i32_0 = arith.constant 0 : i32
    %c0_i32_1 = arith.constant 0 : i32
    return %c0_i32, %c0_i32_0 : i32, i32
  }
  func.func @transform_3(%arg0: i32) -> (i32, i32) {
    %c0_i32 = arith.constant 0 : i32
    %c0_i32_0 = arith.constant 0 : i32
    %c0_i32_1 = arith.constant 0 : i32
    return %c0_i32, %c0_i32_0 : i32, i32
  }
  func.func @transform_4(%arg0: i32) -> (i32, i32) {
    %c0_i32 = arith.constant 0 : i32
    %c0_i32_0 = arith.constant 0 : i32
    %c0_i32_1 = arith.constant 0 : i32
    return %c0_i32, %c0_i32_0 : i32, i32
  }
  func.func @transform_5(%arg0: i32) -> (i32, i32) {
    %c0_i32 = arith.constant 0 : i32
    %c0_i32_0 = arith.constant 0 : i32
    %c0_i32_1 = arith.constant 0 : i32
    return %c0_i32, %c0_i32_0 : i32, i32
  }
  func.func @transform_6(%arg0: i32) -> (i32, i32) {
    %c0_i32 = arith.constant 0 : i32
    %c0_i32_0 = arith.constant 0 : i32
    %c0_i32_1 = arith.constant 0 : i32
    return %c0_i32, %c0_i32_0 : i32, i32
  }
  func.func @transform_7(%arg0: i32) -> (i32, i32) {
    %c0_i32 = arith.constant 0 : i32
    %c0_i32_0 = arith.constant 0 : i32
    %c0_i32_1 = arith.constant 0 : i32
    return %c0_i32, %c0_i32_0 : i32, i32
  }
  func.func @transform_8(%arg0: i32) -> (i32, i32) {
    %c0_i32 = arith.constant 0 : i32
    %c0_i32_0 = arith.constant 0 : i32
    %c0_i32_1 = arith.constant 0 : i32
    return %c0_i32, %c0_i32_0 : i32, i32
  }
  func.func @transform_9(%arg0: i32) -> (i32, i32) {
    %c0_i32 = arith.constant 0 : i32
    %c0_i32_0 = arith.constant 0 : i32
    %c0_i32_1 = arith.constant 0 : i32
    return %c0_i32, %c0_i32_0 : i32, i32
  }
  func.func @transform_10(%arg0: i32) -> (i32, i32) {
    %c0_i32 = arith.constant 0 : i32
    %c0_i32_0 = arith.constant 0 : i32
    %c0_i32_1 = arith.constant 0 : i32
    return %c0_i32, %c0_i32_0 : i32, i32
  }
  func.func @transform_11(%arg0: i32) -> (i32, i32) {
    %c0_i32 = arith.constant 0 : i32
    %c0_i32_0 = arith.constant 0 : i32
    %c0_i32_1 = arith.constant 0 : i32
    return %c0_i32, %c0_i32_0 : i32, i32
  }
  func.func @transform_12(%arg0: i32) -> (i32, i32) {
    %c0_i32 = arith.constant 0 : i32
    %c0_i32_0 = arith.constant 0 : i32
    %c0_i32_1 = arith.constant 0 : i32
    return %c0_i32, %c0_i32_0 : i32, i32
  }
  func.func @transform_13(%arg0: i32) -> (i32, i32) {
    %c0_i32 = arith.constant 0 : i32
    %c0_i32_0 = arith.constant 0 : i32
    return %c0_i32, %arg0 : i32, i32
  }
}

</mosaic_0001>

<llo_original>
// kernel: val_net_forward.1
$region0: #{val_net_forward.1}
  #allocation0 [shape = 'u32[]', space=smem, size = 0x4, offset = 0x4, fixed_abs, tag = 'smem constant byte address 0x4 - core index']
  #allocation1 [shape = 'u32[72,128]{1,0:T(1,128)}', space=vmem, size = 0x9000, scoped, tag = 'internal scratch']
  %s0 = inlined_call_operand.vmem [shape: bf16[64,384], index: 0, kind: input, shape index: {}]
  %s1 = inlined_call_operand.vmem [shape: bf16[256,64], index: 1, kind: input, shape index: {}]
  %s2 = inlined_call_operand.vmem [shape: bf16[512,256], index: 2, kind: input, shape index: {}]
  %s3 = inlined_call_operand.vmem [shape: bf16[32,512], index: 3, kind: input, shape index: {}]
  %s4 = inlined_call_operand.vmem [shape: bf16[32,32], index: 4, kind: input, shape index: {}]
  %s5 = inlined_call_operand.vmem [shape: bf16[512,32], index: 5, kind: input, shape index: {}]
  %s6 = inlined_call_operand.vmem [shape: bf16[8,512], index: 6, kind: input, shape index: {}]
  %s7 = inlined_call_operand.vmem [shape: f32[256,1], index: 7, kind: input, shape index: {}]
  %s8 = inlined_call_operand.vmem [shape: f32[512,1], index: 8, kind: input, shape index: {}]
  %s9 = inlined_call_operand.vmem [shape: f32[32,1], index: 9, kind: input, shape index: {}]
  %s10 = inlined_call_operand.vmem [shape: f32[32,1], index: 10, kind: input, shape index: {}]
  %s11 = inlined_call_operand.vmem [shape: f32[512,1], index: 11, kind: input, shape index: {}]
  %s12 = inlined_call_operand.vmem [shape: f32[8,1], index: 12, kind: input, shape index: {}]
  %s13 = inlined_call_operand.vmem [shape: f32[8,384], index: 13, kind: output, shape index: {}]
  %s14 = sld [smem:[#allocation0]]
  $region126: #{val_net_forward.1} parent=0
    _
  %s16 = ssub.s32 1, %s14
  %s17 = scalar_select 0, %s16, %s14
  $region1: #{val_net_forward.1} parent=0
    #allocation2 [shape = 'u8[32768]{0}', space=vmem, size = 0x8000, scoped, tag = 'input window, operand 0']
    loop: start=0, step=1, limit=5
    $region2: #{val_net_forward.1} parent=1 // loop_pre_header
      _
    $region3: #{val_net_forward.1} parent=1 // loop_header
      %s19 = sphi 0, %s23
      %p20 = scmp.ge.s32.totalorder %s19, 5
      %s29 = sphi 0, %s31
      %s32 = sphi 0, %s29
      %s33 = sphi 0, %s32
      %s49 = sphi 0, %s33
      %s53 = sphi 0, %s53
      %s55 = sphi 0, %s53
      %s56 = sphi 0, %s55
      %s70 = sphi 0, %s56
      %s74 = sphi 0, %s74
      %s76 = sphi 0, %s74
      %s77 = sphi 0, %s76
      %s91 = sphi 0, %s77
      %s95 = sphi 0, %s95
      %s97 = sphi 0, %s95
      %s98 = sphi 0, %s97
      %s112 = sphi 0, %s98
      %s116 = sphi 0, %s116
      %s118 = sphi 0, %s116
      %s119 = sphi 0, %s118
      %s133 = sphi 0, %s119
      %s137 = sphi 0, %s137
      %s139 = sphi 0, %s137
      %s140 = sphi 0, %s139
      %s154 = sphi 0, %s140
      %s158 = sphi 0, %s158
      %s160 = sphi 0, %s158
      %s161 = sphi 0, %s160
      %s175 = sphi 0, %s161
      %s179 = sphi 0, %s179
      %s181 = sphi 0, %s179
      %s182 = sphi 0, %s181
      %s196 = sphi 0, %s182
      %s200 = sphi 0, %s200
      %s202 = sphi 0, %s200
      %s203 = sphi 0, %s202
      %s217 = sphi 0, %s203
      %s221 = sphi 0, %s221
      %s223 = sphi 0, %s221
      %s224 = sphi 0, %s223
      %s238 = sphi 0, %s224
      %s242 = sphi 0, %s242
      %s244 = sphi 0, %s242
      %s245 = sphi 0, %s244
      %s259 = sphi 0, %s245
      %s263 = sphi 0, %s263
      %s265 = sphi 0, %s263
      %s266 = sphi 0, %s265
      %s280 = sphi 0, %s266
      %s284 = sphi 0, %s284
      %s286 = sphi 0, %s284
      %s287 = sphi 0, %s286
      %s301 = sphi 0, %s287
      %s307 = sphi 0, %s309
      %s310 = sphi 0, %s307
      %s311 = sphi 0, %s310
      %s327 = sphi 0, %s311
    $region4: #{val_net_forward.1} parent=1 // loop_header_branch
      %22 = sbr.rel (%p20) target = $region8
    $region5: #{val_net_forward.1} parent=1 // loop_body
      %s24 = ssub.s32 %s19, 1
      %s25 = ssub.s32 %s19, 2
      %s26 = sadd.s32 %s19, 1
      %s27 = ssub.s32 %s19, %s26
      %p28 = scmp.eq.s32.totalorder %s27, 0
      %s30 = sadd.s32 %s29, 1
      %s31 = scalar_select %p28, %s29, %s30
      %p34 = pneg %p28
      %p35 = scmp.eq.s32.totalorder %s19, 2
      %p36 = por %p34, %p35
      %p37 = scmp.ne.s32.totalorder %s29, %s32
      %p38 = scmp.eq.s32.totalorder %s19, 0
      %p39 = por %p37, %p38
      %p40 = scmp.ne.s32.totalorder %s29, %s32
      %p41 = scmp.eq.s32.totalorder %s24, 2
      %p42 = por %p40, %p41
      %p43 = scmp.ne.s32.totalorder %s32, %s33
      %p44 = scmp.eq.s32.totalorder %s24, 0
      %p45 = por %p43, %p44
      %p46 = scmp.ne.s32.totalorder %s32, %s33
      %p47 = scmp.eq.s32.totalorder %s25, 2
      %p48 = por %p46, %p47
      %p50 = scmp.ne.s32.totalorder %s33, %s49
      %p51 = scmp.eq.s32.totalorder %s25, 0
      %p52 = por %p50, %p51
      %s54 = sadd.s32 %s53, 1
      %p57 = scmp.eq.s32.totalorder %s19, 2
      %p58 = scmp.ne.s32.totalorder %s53, %s55
      %p59 = scmp.eq.s32.totalorder %s19, 0
      %p60 = por %p58, %p59
      %p61 = scmp.ne.s32.totalorder %s53, %s55
      %p62 = scmp.eq.s32.totalorder %s24, 2
      %p63 = por %p61, %p62
      %p64 = scmp.ne.s32.totalorder %s55, %s56
      %p65 = scmp.eq.s32.totalorder %s24, 0
      %p66 = por %p64, %p65
      %p67 = scmp.ne.s32.totalorder %s55, %s56
      %p68 = scmp.eq.s32.totalorder %s25, 2
      %p69 = por %p67, %p68
      %p71 = scmp.ne.s32.totalorder %s56, %s70
      %p72 = scmp.eq.s32.totalorder %s25, 0
      %p73 = por %p71, %p72
      %s75 = sadd.s32 %s74, 1
      %p78 = scmp.eq.s32.totalorder %s19, 2
      %p79 = scmp.ne.s32.totalorder %s74, %s76
      %p80 = scmp.eq.s32.totalorder %s19, 0
      %p81 = por %p79, %p80
      %p82 = scmp.ne.s32.totalorder %s74, %s76
      %p83 = scmp.eq.s32.totalorder %s24, 2
      %p84 = por %p82, %p83
      %p85 = scmp.ne.s32.totalorder %s76, %s77
      %p86 = scmp.eq.s32.totalorder %s24, 0
      %p87 = por %p85, %p86
      %p88 = scmp.ne.s32.totalorder %s76, %s77
      %p89 = scmp.eq.s32.totalorder %s25, 2
      %p90 = por %p88, %p89
      %p92 = scmp.ne.s32.totalorder %s77, %s91
      %p93 = scmp.eq.s32.totalorder %s25, 0
      %p94 = por %p92, %p93
      %s96 = sadd.s32 %s95, 1
      %p99 = scmp.eq.s32.totalorder %s19, 2
      %p100 = scmp.ne.s32.totalorder %s95, %s97
      %p101 = scmp.eq.s32.totalorder %s19, 0
      %p102 = por %p100, %p101
      %p103 = scmp.ne.s32.totalorder %s95, %s97
      %p104 = scmp.eq.s32.totalorder %s24, 2
      %p105 = por %p103, %p104
      %p106 = scmp.ne.s32.totalorder %s97, %s98
      %p107 = scmp.eq.s32.totalorder %s24, 0
      %p108 = por %p106, %p107
      %p109 = scmp.ne.s32.totalorder %s97, %s98
      %p110 = scmp.eq.s32.totalorder %s25, 2
      %p111 = por %p109, %p110
      %p113 = scmp.ne.s32.totalorder %s98, %s112
      %p114 = scmp.eq.s32.totalorder %s25, 0
      %p115 = por %p113, %p114
      %s117 = sadd.s32 %s116, 1
      %p120 = scmp.eq.s32.totalorder %s19, 2
      %p121 = scmp.ne.s32.totalorder %s116, %s118
      %p122 = scmp.eq.s32.totalorder %s19, 0
      %p123 = por %p121, %p122
      %p124 = scmp.ne.s32.totalorder %s116, %s118
      %p125 = scmp.eq.s32.totalorder %s24, 2
      %p126 = por %p124, %p125
      %p127 = scmp.ne.s32.totalorder %s118, %s119
      %p128 = scmp.eq.s32.totalorder %s24, 0
      %p129 = por %p127, %p128
      %p130 = scmp.ne.s32.totalorder %s118, %s119
      %p131 = scmp.eq.s32.totalorder %s25, 2
      %p132 = por %p130, %p131
      %p134 = scmp.ne.s32.totalorder %s119, %s133
      %p135 = scmp.eq.s32.totalorder %s25, 0
      %p136 = por %p134, %p135
      %s138 = sadd.s32 %s137, 1
      %p141 = scmp.eq.s32.totalorder %s19, 2
      %p142 = scmp.ne.s32.totalorder %s137, %s139
      %p143 = scmp.eq.s32.totalorder %s19, 0
      %p144 = por %p142, %p143
      %p145 = scmp.ne.s32.totalorder %s137, %s139
      %p146 = scmp.eq.s32.totalorder %s24, 2
      %p147 = por %p145, %p146
      %p148 = scmp.ne.s32.totalorder %s139, %s140
      %p149 = scmp.eq.s32.totalorder %s24, 0
      %p150 = por %p148, %p149
      %p151 = scmp.ne.s32.totalorder %s139, %s140
      %p152 = scmp.eq.s32.totalorder %s25, 2
      %p153 = por %p151, %p152
      %p155 = scmp.ne.s32.totalorder %s140, %s154
      %p156 = scmp.eq.s32.totalorder %s25, 0
      %p157 = por %p155, %p156
      %s159 = sadd.s32 %s158, 1
      %p162 = scmp.eq.s32.totalorder %s19, 2
      %p163 = scmp.ne.s32.totalorder %s158, %s160
      %p164 = scmp.eq.s32.totalorder %s19, 0
      %p165 = por %p163, %p164
      %p166 = scmp.ne.s32.totalorder %s158, %s160
      %p167 = scmp.eq.s32.totalorder %s24, 2
      %p168 = por %p166, %p167
      %p169 = scmp.ne.s32.totalorder %s160, %s161
      %p170 = scmp.eq.s32.totalorder %s24, 0
      %p171 = por %p169, %p170
      %p172 = scmp.ne.s32.totalorder %s160, %s161
      %p173 = scmp.eq.s32.totalorder %s25, 2
      %p174 = por %p172, %p173
      %p176 = scmp.ne.s32.totalorder %s161, %s175
      %p177 = scmp.eq.s32.totalorder %s25, 0
      %p178 = por %p176, %p177
      %s180 = sadd.s32 %s179, 1
      %p183 = scmp.eq.s32.totalorder %s19, 2
      %p184 = scmp.ne.s32.totalorder %s179, %s181
      %p185 = scmp.eq.s32.totalorder %s19, 0
      %p186 = por %p184, %p185
      %p187 = scmp.ne.s32.totalorder %s179, %s181
      %p188 = scmp.eq.s32.totalorder %s24, 2
      %p189 = por %p187, %p188
      %p190 = scmp.ne.s32.totalorder %s181, %s182
      %p191 = scmp.eq.s32.totalorder %s24, 0
      %p192 = por %p190, %p191
      %p193 = scmp.ne.s32.totalorder %s181, %s182
      %p194 = scmp.eq.s32.totalorder %s25, 2
      %p195 = por %p193, %p194
      %p197 = scmp.ne.s32.totalorder %s182, %s196
      %p198 = scmp.eq.s32.totalorder %s25, 0
      %p199 = por %p197, %p198
      %s201 = sadd.s32 %s200, 1
      %p204 = scmp.eq.s32.totalorder %s19, 2
      %p205 = scmp.ne.s32.totalorder %s200, %s202
      %p206 = scmp.eq.s32.totalorder %s19, 0
      %p207 = por %p205, %p206
      %p208 = scmp.ne.s32.totalorder %s200, %s202
      %p209 = scmp.eq.s32.totalorder %s24, 2
      %p210 = por %p208, %p209
      %p211 = scmp.ne.s32.totalorder %s202, %s203
      %p212 = scmp.eq.s32.totalorder %s24, 0
      %p213 = por %p211, %p212
      %p214 = scmp.ne.s32.totalorder %s202, %s203
      %p215 = scmp.eq.s32.totalorder %s25, 2
      %p216 = por %p214, %p215
      %p218 = scmp.ne.s32.totalorder %s203, %s217
      %p219 = scmp.eq.s32.totalorder %s25, 0
      %p220 = por %p218, %p219
      %s222 = sadd.s32 %s221, 1
      %p225 = scmp.eq.s32.totalorder %s19, 2
      %p226 = scmp.ne.s32.totalorder %s221, %s223
      %p227 = scmp.eq.s32.totalorder %s19, 0
      %p228 = por %p226, %p227
      %p229 = scmp.ne.s32.totalorder %s221, %s223
      %p230 = scmp.eq.s32.totalorder %s24, 2
      %p231 = por %p229, %p230
      %p232 = scmp.ne.s32.totalorder %s223, %s224
      %p233 = scmp.eq.s32.totalorder %s24, 0
      %p234 = por %p232, %p233
      %p235 = scmp.ne.s32.totalorder %s223, %s224
      %p236 = scmp.eq.s32.totalorder %s25, 2
      %p237 = por %p235, %p236
      %p239 = scmp.ne.s32.totalorder %s224, %s238
      %p240 = scmp.eq.s32.totalorder %s25, 0
      %p241 = por %p239, %p240
      %s243 = sadd.s32 %s242, 1
      %p246 = scmp.eq.s32.totalorder %s19, 2
      %p247 = scmp.ne.s32.totalorder %s242, %s244
      %p248 = scmp.eq.s32.totalorder %s19, 0
      %p249 = por %p247, %p248
      %p250 = scmp.ne.s32.totalorder %s242, %s244
      %p251 = scmp.eq.s32.totalorder %s24, 2
      %p252 = por %p250, %p251
      %p253 = scmp.ne.s32.totalorder %s244, %s245
      %p254 = scmp.eq.s32.totalorder %s24, 0
      %p255 = por %p253, %p254
      %p256 = scmp.ne.s32.totalorder %s244, %s245
      %p257 = scmp.eq.s32.totalorder %s25, 2
      %p258 = por %p256, %p257
      %p260 = scmp.ne.s32.totalorder %s245, %s259
      %p261 = scmp.eq.s32.totalorder %s25, 0
      %p262 = por %p260, %p261
      %s264 = sadd.s32 %s263, 1
      %p267 = scmp.eq.s32.totalorder %s19, 2
      %p268 = scmp.ne.s32.totalorder %s263, %s265
      %p269 = scmp.eq.s32.totalorder %s19, 0
      %p270 = por %p268, %p269
      %p271 = scmp.ne.s32.totalorder %s263, %s265
      %p272 = scmp.eq.s32.totalorder %s24, 2
      %p273 = por %p271, %p272
      %p274 = scmp.ne.s32.totalorder %s265, %s266
      %p275 = scmp.eq.s32.totalorder %s24, 0
      %p276 = por %p274, %p275
      %p277 = scmp.ne.s32.totalorder %s265, %s266
      %p278 = scmp.eq.s32.totalorder %s25, 2
      %p279 = por %p277, %p278
      %p281 = scmp.ne.s32.totalorder %s266, %s280
      %p282 = scmp.eq.s32.totalorder %s25, 0
      %p283 = por %p281, %p282
      %s285 = sadd.s32 %s284, 1
      %p288 = scmp.eq.s32.totalorder %s19, 2
      %p289 = scmp.ne.s32.totalorder %s284, %s286
      %p290 = scmp.eq.s32.totalorder %s19, 0
      %p291 = por %p289, %p290
      %p292 = scmp.ne.s32.totalorder %s284, %s286
      %p293 = scmp.eq.s32.totalorder %s24, 2
      %p294 = por %p292, %p293
      %p295 = scmp.ne.s32.totalorder %s286, %s287
      %p296 = scmp.eq.s32.totalorder %s24, 0
      %p297 = por %p295, %p296
      %p298 = scmp.ne.s32.totalorder %s286, %s287
      %p299 = scmp.eq.s32.totalorder %s25, 2
      %p300 = por %p298, %p299
      %p302 = scmp.ne.s32.totalorder %s287, %s301
      %p303 = scmp.eq.s32.totalorder %s25, 0
      %p304 = por %p302, %p303
      %s305 = ssub.s32 %s19, %s26
      %p306 = scmp.eq.s32.totalorder %s305, 0
      %s308 = sadd.s32 %s307, 1
      %s309 = scalar_select %p306, %s307, %s308
      %p312 = pneg %p306
      %p313 = scmp.eq.s32.totalorder %s19, 2
      %p314 = por %p312, %p313
      %p315 = scmp.ne.s32.totalorder %s307, %s310
      %p316 = scmp.eq.s32.totalorder %s19, 0
      %p317 = por %p315, %p316
      %p318 = scmp.ne.s32.totalorder %s307, %s310
      %p319 = scmp.eq.s32.totalorder %s24, 2
      %p320 = por %p318, %p319
      %p321 = scmp.ne.s32.totalorder %s310, %s311
      %p322 = scmp.eq.s32.totalorder %s24, 0
      %p323 = por %p321, %p322
      %p324 = scmp.ne.s32.totalorder %s310, %s311
      %p325 = scmp.eq.s32.totalorder %s25, 2
      %p326 = por %p324, %p325
      %p328 = scmp.ne.s32.totalorder %s311, %s327
      %p329 = scmp.eq.s32.totalorder %s25, 0
      %p330 = por %p328, %p329
      %p331 = scmp.le.s32.totalorder 1, %s19
      %p332 = scmp.lt.s32.totalorder %s19, 4
      %p333 = pnand %p331, %p332
      %p334 = pneg %p333
      // Predicated region
      $region9: #{val_net_forward.1} parent=5 // pred_check
        _
      $region10: #{val_net_forward.1} parent=5 // pred_check_branch
        %336 = sbr.rel (%p333) target = $region12
      $region11: #{val_net_forward.1} parent=5 // pred_region
        %s337 = ssub.s32 %s19, 1
        // Predicated region
        $region13: #{val_net_forward.1} parent=11 // pred_check
          %p338 = pneg %p66
        $region14: #{val_net_forward.1} parent=11 // pred_check_branch
          %340 = sbr.rel (%p338) target = $region16
        $region15: #{val_net_forward.1} parent=11 // pred_region
          _
        $region16: #{val_net_forward.1} parent=11 // pred_fallthru
          _
        // Predicated region
        $region17: #{val_net_forward.1} parent=11 // pred_check
          %p341 = pneg %p87
        $region18: #{val_net_forward.1} parent=11 // pred_check_branch
          %343 = sbr.rel (%p341) target = $region20
        $region19: #{val_net_forward.1} parent=11 // pred_region
          _
        $region20: #{val_net_forward.1} parent=11 // pred_fallthru
          _
        // Predicated region
        $region21: #{val_net_forward.1} parent=11 // pred_check
          %p344 = pneg %p108
        $region22: #{val_net_forward.1} parent=11 // pred_check_branch
          %346 = sbr.rel (%p344) target = $region24
        $region23: #{val_net_forward.1} parent=11 // pred_region
          _
        $region24: #{val_net_forward.1} parent=11 // pred_fallthru
          _
        // Predicated region
        $region25: #{val_net_forward.1} parent=11 // pred_check
          %p347 = pneg %p129
        $region26: #{val_net_forward.1} parent=11 // pred_check_branch
          %349 = sbr.rel (%p347) target = $region28
        $region27: #{val_net_forward.1} parent=11 // pred_region
          _
        $region28: #{val_net_forward.1} parent=11 // pred_fallthru
          _
        // Predicated region
        $region29: #{val_net_forward.1} parent=11 // pred_check
          %p350 = pneg %p150
        $region30: #{val_net_forward.1} parent=11 // pred_check_branch
          %352 = sbr.rel (%p350) target = $region32
        $region31: #{val_net_forward.1} parent=11 // pred_region
          _
        $region32: #{val_net_forward.1} parent=11 // pred_fallthru
          _
        // Predicated region
        $region33: #{val_net_forward.1} parent=11 // pred_check
          %p353 = pneg %p171
        $region34: #{val_net_forward.1} parent=11 // pred_check_branch
          %355 = sbr.rel (%p353) target = $region36
        $region35: #{val_net_forward.1} parent=11 // pred_region
          _
        $region36: #{val_net_forward.1} parent=11 // pred_fallthru
          _
        // Predicated region
        $region37: #{val_net_forward.1} parent=11 // pred_check
          %p356 = pneg %p192
        $region38: #{val_net_forward.1} parent=11 // pred_check_branch
          %358 = sbr.rel (%p356) target = $region40
        $region39: #{val_net_forward.1} parent=11 // pred_region
          _
        $region40: #{val_net_forward.1} parent=11 // pred_fallthru
          _
        // Predicated region
        $region41: #{val_net_forward.1} parent=11 // pred_check
          %p359 = pneg %p213
        $region42: #{val_net_forward.1} parent=11 // pred_check_branch
          %361 = sbr.rel (%p359) target = $region44
        $region43: #{val_net_forward.1} parent=11 // pred_region
          _
        $region44: #{val_net_forward.1} parent=11 // pred_fallthru
          _
        // Predicated region
        $region45: #{val_net_forward.1} parent=11 // pred_check
          %p362 = pneg %p234
        $region46: #{val_net_forward.1} parent=11 // pred_check_branch
          %364 = sbr.rel (%p362) target = $region48
        $region47: #{val_net_forward.1} parent=11 // pred_region
          _
        $region48: #{val_net_forward.1} parent=11 // pred_fallthru
          _
        // Predicated region
        $region49: #{val_net_forward.1} parent=11 // pred_check
          %p365 = pneg %p255
        $region50: #{val_net_forward.1} parent=11 // pred_check_branch
          %367 = sbr.rel (%p365) target = $region52
        $region51: #{val_net_forward.1} parent=11 // pred_region
          _
        $region52: #{val_net_forward.1} parent=11 // pred_fallthru
          _
        // Predicated region
        $region53: #{val_net_forward.1} parent=11 // pred_check
          %p368 = pneg %p276
        $region54: #{val_net_forward.1} parent=11 // pred_check_branch
          %370 = sbr.rel (%p368) target = $region56
        $region55: #{val_net_forward.1} parent=11 // pred_region
          _
        $region56: #{val_net_forward.1} parent=11 // pred_fallthru
          _
        // Predicated region
        $region57: #{val_net_forward.1} parent=11 // pred_check
          %p371 = pneg %p297
        $region58: #{val_net_forward.1} parent=11 // pred_check_branch
          %373 = sbr.rel (%p371) target = $region60
        $region59: #{val_net_forward.1} parent=11 // pred_region
          _
        $region60: #{val_net_forward.1} parent=11 // pred_fallthru
          _
      $region12: #{val_net_forward.1} parent=5 // pred_fallthru
        _
      %p374 = scmp.lt.s32.totalorder %s19, 3
      // Predicated region
      $region61: #{val_net_forward.1} parent=5 // pred_check
        %p375 = pneg %p374
      $region62: #{val_net_forward.1} parent=5 // pred_check_branch
        %377 = sbr.rel (%p375) target = $region64
      $region63: #{val_net_forward.1} parent=5 // pred_region
        // Predicated region
        $region65: #{val_net_forward.1} parent=63 // pred_check
          %p378 = pneg %p39
        $region66: #{val_net_forward.1} parent=63 // pred_check_branch
          %380 = sbr.rel (%p378) target = $region68
        $region67: #{val_net_forward.1} parent=63 // pred_region
          %s381 = sand.u32 %s29, 1
          %s382 = sand.u32 %s29, 1
          %s383 = smul.addr %s382, 32
          %s384 = scalar_lea.vmem [#allocation2], %s383
          %s385 = smul.addr %s19, 4
          %s386 = scalar_lea.vmem %s0, %s385
          // Predicated region
          $region69: #{val_net_forward.1} parent=67 // pred_check
            _
          $region70: #{val_net_forward.1} parent=67 // pred_check_branch
            %388 = sbr.rel (0) target = $region72
          $region71: #{val_net_forward.1} parent=67 // pred_region
            // Predicated region
            $region73: #{val_net_forward.1} parent=71 // pred_check
              _
            $region74: #{val_net_forward.1} parent=71 // pred_check_branch
              %390 = sbr.rel target = $region76
            $region75: #{val_net_forward.1} parent=71 // pred_region
              // Predicated region
              $region88: #{val_net_forward.1} parent=75 // pred_check
                _
              $region89: #{val_net_forward.1} parent=75 // pred_check_branch
                %420 = sbr.rel (0) target = $region91
              $region90: #{val_net_forward.1} parent=75 // pred_region
                loop: start=0, step=1, limit=1
                $region92: #{val_net_forward.1} parent=90 // loop_pre_header
                  _
                $region93: #{val_net_forward.1} parent=90 // loop_header
                  %s422 = sphi 0, %s426
                  %p423 = scmp.ge.s32.totalorder %s422, 1
                  %s427 = sphi %s386, %s386
                  %s428 = sphi %s384, %s384
                $region94: #{val_net_forward.1} parent=90 // loop_header_branch
                  %425 = sbr.rel (%p423) target = $region98
                $region95: #{val_net_forward.1} parent=90 // loop_body
                  _
                $region96: #{val_net_forward.1} parent=90 // loop_footer
                  %s426 = sadd.s32 1, %s422
                $region97: #{val_net_forward.1} parent=90 // loop_footer_branch
                  %421 = sbr.rel target = $region93
                $region98: #{val_net_forward.1} parent=90 // loop_exit
                  _
                %s430 = ssub.s32 16, 1
                loop: start=0, step=1, limit=1
                $region99: #{val_net_forward.1} parent=90 // loop_pre_header
                  _
                $region100: #{val_net_forward.1} parent=90 // loop_header
                  %s432 = sphi 0, %s436
                  %p433 = scmp.ge.s32.totalorder %s432, 1
                  %s437 = sphi %s386, %s386
                  %s438 = sphi %s384, %s384
                $region101: #{val_net_forward.1} parent=90 // loop_header_branch
                  %435 = sbr.rel (%p433) target = $region105
                $region102: #{val_net_forward.1} parent=90 // loop_body
                  %v439 = vld [vmem:[%s437] sm:%s430]
                  %440 = vst [vmem:[%s438] sm:%s430] %v439
                  %v441 = vld [vmem:[%s437 + $0xc] sm:%s430]
                  %442 = vst [vmem:[%s438 + $0x4] sm:%s430] %v441
                  %v443 = vld [vmem:[%s437 + $0x18] sm:%s430]
                  %444 = vst [vmem:[%s438 + $0x8] sm:%s430] %v443
                  %v445 = vld [vmem:[%s437 + $0x24] sm:%s430]
                  %446 = vst [vmem:[%s438 + $0xc] sm:%s430] %v445
                  %v447 = vld [vmem:[%s437 + $0x30] sm:%s430]
                  %448 = vst [vmem:[%s438 + $0x10] sm:%s430] %v447
                  %v449 = vld [vmem:[%s437 + $0x3c] sm:%s430]
                  %450 = vst [vmem:[%s438 + $0x14] sm:%s430] %v449
                  %v451 = vld [vmem:[%s437 + $0x48] sm:%s430]
                  %452 = vst [vmem:[%s438 + $0x18] sm:%s430] %v451
                  %v453 = vld [vmem:[%s437 + $0x54] sm:%s430]
                  %454 = vst [vmem:[%s438 + $0x1c] sm:%s430] %v453
                $region103: #{val_net_forward.1} parent=90 // loop_footer
                  %s436 = sadd.s32 1, %s432
                $region104: #{val_net_forward.1} parent=90 // loop_footer_branch
                  %431 = sbr.rel target = $region100
                $region105: #{val_net_forward.1} parent=90 // loop_exit
                  _
              $region91: #{val_net_forward.1} parent=75 // pred_fallthru
                _
            $region76: #{val_net_forward.1} parent=71 // pred_fallthru
              _
            // Predicated region
            $region77: #{val_net_forward.1} parent=71 // pred_check
              _
            $region78: #{val_net_forward.1} parent=71 // pred_check_branch
              %392 = sbr.rel (0) target = $region80
            $region79: #{val_net_forward.1} parent=71 // pred_region
              %s394 = ssub.s32 16, 1
              loop: start=0, step=1, limit=1
              $region81: #{val_net_forward.1} parent=79 // loop_pre_header
                _
              $region82: #{val_net_forward.1} parent=79 // loop_header
                %s396 = sphi 0, %s400
                %p397 = scmp.ge.s32.totalorder %s396, 1
                %s401 = sphi %s386, %s386
                %s402 = sphi %s384, %s384
              $region83: #{val_net_forward.1} parent=79 // loop_header_branch
                %399 = sbr.rel (%p397) target = $region87
              $region84: #{val_net_forward.1} parent=79 // loop_body
                %v403 = vld [vmem:[%s401] sm:%s394]
                %404 = vst [vmem:[%s402] sm:%s394] %v403
                %v405 = vld [vmem:[%s401 + $0xc] sm:%s394]
                %406 = vst [vmem:[%s402 + $0x4] sm:%s394] %v405
                %v407 = vld [vmem:[%s401 + $0x18] sm:%s394]
                %408 = vst [vmem:[%s402 + $0x8] sm:%s394] %v407
                %v409 = vld [vmem:[%s401 + $0x24] sm:%s394]
                %410 = vst [vmem:[%s402 + $0xc] sm:%s394] %v409
                %v411 = vld [vmem:[%s401 + $0x30] sm:%s394]
                %412 = vst [vmem:[%s402 + $0x10] sm:%s394] %v411
                %v413 = vld [vmem:[%s401 + $0x3c] sm:%s394]
                %414 = vst [vmem:[%s402 + $0x14] sm:%s394] %v413
                %v415 = vld [vmem:[%s401 + $0x48] sm:%s394]
                %416 = vst [vmem:[%s402 + $0x18] sm:%s394] %v415
                %v417 = vld [vmem:[%s401 + $0x54] sm:%s394]
                %418 = vst [vmem:[%s402 + $0x1c] sm:%s394] %v417
              $region85: #{val_net_forward.1} parent=79 // loop_footer
                %s400 = sadd.s32 1, %s396
              $region86: #{val_net_forward.1} parent=79 // loop_footer_branch
                %395 = sbr.rel target = $region82
              $region87: #{val_net_forward.1} parent=79 // loop_exit
                _
            $region80: #{val_net_forward.1} parent=71 // pred_fallthru
              _
          $region72: #{val_net_forward.1} parent=67 // pred_fallthru
            _
          %455 = vnop
        $region68: #{val_net_forward.1} parent=63 // pred_fallthru
          _
      $region64: #{val_net_forward.1} parent=5 // pred_fallthru
        _
      %p456 = scmp.le.s32.totalorder 1, %s19
      %p457 = scmp.lt.s32.totalorder %s19, 4
      %p458 = pnand %p456, %p457
      %p459 = pneg %p458
      // Predicated region
      $region106: #{val_net_forward.1} parent=5 // pred_check
        _
      $region107: #{val_net_forward.1} parent=5 // pred_check_branch
        %461 = sbr.rel (%p458) target = $region109
      $region108: #{val_net_forward.1} parent=5 // pred_region
        %s462 = ssub.s32 %s19, 1
        %s463 = sand.u32 %s32, 1
        %s464 = sand.u32 %s32, 1
        %s465 = smul.addr %s464, 32
        %s466 = scalar_lea.vmem [#allocation2], %s465
        // Predicated region
        $region110: #{val_net_forward.1} parent=108 // pred_check
          %p467 = pneg %p45
        $region111: #{val_net_forward.1} parent=108 // pred_check_branch
          %469 = sbr.rel (%p467) target = $region113
        $region112: #{val_net_forward.1} parent=108 // pred_region
          _
        $region113: #{val_net_forward.1} parent=108 // pred_fallthru
          _
        %s470 = sand.u32 %s32, 1
        %s471 = sand.u32 %s32, 1
        %s472 = smul.addr %s471, 32
        %s473 = scalar_lea.vmem [#allocation2], %s472
        %p474 = pneg %p45
        %p475 = pneg %p42
        %p476 = pneg %p66
        %p477 = pneg %p63
        %p478 = pneg %p87
        %p479 = pneg %p84
        %p480 = pneg %p108
        %p481 = pneg %p105
        %p482 = pneg %p129
        %p483 = pneg %p126
        %p484 = pneg %p150
        %p485 = pneg %p147
        %p486 = pneg %p171
        %p487 = pneg %p168
        %p488 = pneg %p192
        %p489 = pneg %p189
        %p490 = pneg %p213
        %p491 = pneg %p210
        %p492 = pneg %p234
        %p493 = pneg %p231
        %p494 = pneg %p255
        %p495 = pneg %p252
        %p496 = pneg %p276
        %p497 = pneg %p273
        %p498 = pneg %p297
        %p499 = pneg %p294
        %p500 = pneg %p323
        %p501 = pneg %p320
        %p502 = scmp.lt.s32.totalorder %s24, 2
        %s503 = scalar_select %p502, %s24, 2
        %s504 = smul.addr %s503, 8
        %s505 = scalar_lea.vmem %s13, %s504
        %p506 = scmp.lt.s32.totalorder %s24, 2
        %s507 = scalar_select %p506, %s24, 2
        %s508 = smul.addr %s507, 8
        %s509 = scalar_lea.vmem %s13, %s508
        %v511 = vld [vmem:[%s466] sm:$0xf]
        %v512 = vld [vmem:[%s466 + $0x4] sm:$0xf]
        %v513 = vld [vmem:[%s466 + $0x8] sm:$0xf]
        %v514 = vld [vmem:[%s466 + $0xc] sm:$0xf]
        %v515 = vld [vmem:[%s466 + $0x10] sm:$0xf]
        %v516 = vld [vmem:[%s466 + $0x14] sm:$0xf]
        %v517 = vld [vmem:[%s466 + $0x18] sm:$0xf]
        %v518 = vld [vmem:[%s466 + $0x1c] sm:$0xf]
        %v519 = vld [vmem:[%s1] sm:$0xf]
        %v520 = vld [vmem:[%s1 + $0x4] sm:$0xf]
        %v521 = vld [vmem:[%s1 + $0x8] sm:$0xf]
        %v522 = vld [vmem:[%s1 + $0xc] sm:$0xf]
        %v523 = vld [vmem:[%s1 + $0x10] sm:$0xf]
        %v524 = vld [vmem:[%s1 + $0x14] sm:$0xf]
        %v525 = vld [vmem:[%s1 + $0x18] sm:$0xf]
        %v526 = vld [vmem:[%s1 + $0x1c] sm:$0xf]
        %v527 = vld [vmem:[%s1 + $0x20] sm:$0xf]
        %v528 = vld [vmem:[%s1 + $0x24] sm:$0xf]
        %v529 = vld [vmem:[%s1 + $0x28] sm:$0xf]
        %v530 = vld [vmem:[%s1 + $0x2c] sm:$0xf]
        %v531 = vld [vmem:[%s1 + $0x30] sm:$0xf]
        %v532 = vld [vmem:[%s1 + $0x34] sm:$0xf]
        %v533 = vld [vmem:[%s1 + $0x38] sm:$0xf]
        %v534 = vld [vmem:[%s1 + $0x3c] sm:$0xf]
        %v535 = vld [vmem:[%s1 + $0x40] sm:$0xf]
        %v536 = vld [vmem:[%s1 + $0x44] sm:$0xf]
        %v537 = vld [vmem:[%s1 + $0x48] sm:$0xf]
        %v538 = vld [vmem:[%s1 + $0x4c] sm:$0xf]
        %v539 = vld [vmem:[%s1 + $0x50] sm:$0xf]
        %v540 = vld [vmem:[%s1 + $0x54] sm:$0xf]
        %v541 = vld [vmem:[%s1 + $0x58] sm:$0xf]
        %v542 = vld [vmem:[%s1 + $0x5c] sm:$0xf]
        %v543 = vld [vmem:[%s1 + $0x60] sm:$0xf]
        %v544 = vld [vmem:[%s1 + $0x64] sm:$0xf]
        %v545 = vld [vmem:[%s1 + $0x68] sm:$0xf]
        %v546 = vld [vmem:[%s1 + $0x6c] sm:$0xf]
        %v547 = vld [vmem:[%s1 + $0x70] sm:$0xf]
        %v548 = vld [vmem:[%s1 + $0x74] sm:$0xf]
        %v549 = vld [vmem:[%s1 + $0x78] sm:$0xf]
        %v550 = vld [vmem:[%s1 + $0x7c] sm:$0xf]
        %v551 = vld [vmem:[%s7] sm:$0xff]
        %v552 = vld [vmem:[%s7 + $0x8] sm:$0xff]
        %v553 = vld [vmem:[%s7 + $0x10] sm:$0xff]
        %v554 = vld [vmem:[%s7 + $0x18] sm:$0xff]
        %v555 = vld [vmem:[%s7 + $0x20] sm:$0xff]
        %v556 = vld [vmem:[%s7 + $0x28] sm:$0xff]
        %v557 = vld [vmem:[%s7 + $0x30] sm:$0xff]
        %v558 = vld [vmem:[%s7 + $0x38] sm:$0xff]
        %v559 = vld [vmem:[%s7 + $0x40] sm:$0xff]
        %v560 = vld [vmem:[%s7 + $0x48] sm:$0xff]
        %v561 = vld [vmem:[%s7 + $0x50] sm:$0xff]
        %v562 = vld [vmem:[%s7 + $0x58] sm:$0xff]
        %v563 = vld [vmem:[%s7 + $0x60] sm:$0xff]
        %v564 = vld [vmem:[%s7 + $0x68] sm:$0xff]
        %v565 = vld [vmem:[%s7 + $0x70] sm:$0xff]
        %v566 = vld [vmem:[%s7 + $0x78] sm:$0xff]
        %v567 = vld [vmem:[%s7 + $0x80] sm:$0xff]
        %v568 = vld [vmem:[%s7 + $0x88] sm:$0xff]
        %v569 = vld [vmem:[%s7 + $0x90] sm:$0xff]
        %v570 = vld [vmem:[%s7 + $0x98] sm:$0xff]
        %v571 = vld [vmem:[%s7 + $0xa0] sm:$0xff]
        %v572 = vld [vmem:[%s7 + $0xa8] sm:$0xff]
        %v573 = vld [vmem:[%s7 + $0xb0] sm:$0xff]
        %v574 = vld [vmem:[%s7 + $0xb8] sm:$0xff]
        %v575 = vld [vmem:[%s7 + $0xc0] sm:$0xff]
        %v576 = vld [vmem:[%s7 + $0xc8] sm:$0xff]
        %v577 = vld [vmem:[%s7 + $0xd0] sm:$0xff]
        %v578 = vld [vmem:[%s7 + $0xd8] sm:$0xff]
        %v579 = vld [vmem:[%s7 + $0xe0] sm:$0xff]
        %v580 = vld [vmem:[%s7 + $0xe8] sm:$0xff]
        %v581 = vld [vmem:[%s7 + $0xf0] sm:$0xff]
        %v582 = vld [vmem:[%s7 + $0xf8] sm:$0xff]
        %584 = vset.pattern.permute.xlu0 0
        %585 = vperm.xlu0 %584, %v551
        %v586 = vpop.permute.xlu0 %585
        %589 = vset.pattern.permute.xlu0 0
        %590 = vperm.xlu0 %589, %v552
        %v591 = vpop.permute.xlu0 %590
        %594 = vset.pattern.permute.xlu0 0
        %595 = vperm.xlu0 %594, %v553
        %v596 = vpop.permute.xlu0 %595
        %599 = vset.pattern.permute.xlu0 0
        %600 = vperm.xlu0 %599, %v554
        %v601 = vpop.permute.xlu0 %600
        %604 = vset.pattern.permute.xlu0 0
        %605 = vperm.xlu0 %604, %v555
        %v606 = vpop.permute.xlu0 %605
        %609 = vset.pattern.permute.xlu0 0
        %610 = vperm.xlu0 %609, %v556
        %v611 = vpop.permute.xlu0 %610
        %614 = vset.pattern.permute.xlu0 0
        %615 = vperm.xlu0 %614, %v557
        %v616 = vpop.permute.xlu0 %615
        %619 = vset.pattern.permute.xlu0 0
        %620 = vperm.xlu0 %619, %v558
        %v621 = vpop.permute.xlu0 %620
        %624 = vset.pattern.permute.xlu0 0
        %625 = vperm.xlu0 %624, %v559
        %v626 = vpop.permute.xlu0 %625
        %629 = vset.pattern.permute.xlu0 0
        %630 = vperm.xlu0 %629, %v560
        %v631 = vpop.permute.xlu0 %630
        %634 = vset.pattern.permute.xlu0 0
        %635 = vperm.xlu0 %634, %v561
        %v636 = vpop.permute.xlu0 %635
        %639 = vset.pattern.permute.xlu0 0
        %640 = vperm.xlu0 %639, %v562
        %v641 = vpop.permute.xlu0 %640
        %644 = vset.pattern.permute.xlu0 0
        %645 = vperm.xlu0 %644, %v563
        %v646 = vpop.permute.xlu0 %645
        %649 = vset.pattern.permute.xlu0 0
        %650 = vperm.xlu0 %649, %v564
        %v651 = vpop.permute.xlu0 %650
        %654 = vset.pattern.permute.xlu0 0
        %655 = vperm.xlu0 %654, %v565
        %v656 = vpop.permute.xlu0 %655
        %659 = vset.pattern.permute.xlu0 0
        %660 = vperm.xlu0 %659, %v566
        %v661 = vpop.permute.xlu0 %660
        %664 = vset.pattern.permute.xlu0 0
        %665 = vperm.xlu0 %664, %v567
        %v666 = vpop.permute.xlu0 %665
        %669 = vset.pattern.permute.xlu0 0
        %670 = vperm.xlu0 %669, %v568
        %v671 = vpop.permute.xlu0 %670
        %674 = vset.pattern.permute.xlu0 0
        %675 = vperm.xlu0 %674, %v569
        %v676 = vpop.permute.xlu0 %675
        %679 = vset.pattern.permute.xlu0 0
        %680 = vperm.xlu0 %679, %v570
        %v681 = vpop.permute.xlu0 %680
        %684 = vset.pattern.permute.xlu0 0
        %685 = vperm.xlu0 %684, %v571
        %v686 = vpop.permute.xlu0 %685
        %689 = vset.pattern.permute.xlu0 0
        %690 = vperm.xlu0 %689, %v572
        %v691 = vpop.permute.xlu0 %690
        %694 = vset.pattern.permute.xlu0 0
        %695 = vperm.xlu0 %694, %v573
        %v696 = vpop.permute.xlu0 %695
        %699 = vset.pattern.permute.xlu0 0
        %700 = vperm.xlu0 %699, %v574
        %v701 = vpop.permute.xlu0 %700
        %704 = vset.pattern.permute.xlu0 0
        %705 = vperm.xlu0 %704, %v575
        %v706 = vpop.permute.xlu0 %705
        %709 = vset.pattern.permute.xlu0 0
        %710 = vperm.xlu0 %709, %v576
        %v711 = vpop.permute.xlu0 %710
        %714 = vset.pattern.permute.xlu0 0
        %715 = vperm.xlu0 %714, %v577
        %v716 = vpop.permute.xlu0 %715
        %719 = vset.pattern.permute.xlu0 0
        %720 = vperm.xlu0 %719, %v578
        %v721 = vpop.permute.xlu0 %720
        %724 = vset.pattern.permute.xlu0 0
        %725 = vperm.xlu0 %724, %v579
        %v726 = vpop.permute.xlu0 %725
        %729 = vset.pattern.permute.xlu0 0
        %730 = vperm.xlu0 %729, %v580
        %v731 = vpop.permute.xlu0 %730
        %734 = vset.pattern.permute.xlu0 0
        %735 = vperm.xlu0 %734, %v581
        %v736 = vpop.permute.xlu0 %735
        %739 = vset.pattern.permute.xlu0 0
        %740 = vperm.xlu0 %739, %v582
        %v741 = vpop.permute.xlu0 %740
        %v775 = vunpack.c.l.b16 %v519
        %v776 = vunpack.c.l.b16 %v520
        %v777 = vunpack.c.l.b16 %v521
        %v778 = vunpack.c.l.b16 %v522
        %v779 = vunpack.c.l.b16 %v523
        %v780 = vunpack.c.l.b16 %v524
        %v781 = vunpack.c.l.b16 %v525
        %v782 = vunpack.c.l.b16 %v526
        %v783 = vunpack.c.l.b16 %v527
        %v784 = vunpack.c.l.b16 %v528
        %v785 = vunpack.c.l.b16 %v529
        %v786 = vunpack.c.l.b16 %v530
        %v787 = vunpack.c.l.b16 %v531
        %v788 = vunpack.c.l.b16 %v532
        %v789 = vunpack.c.l.b16 %v533
        %v790 = vunpack.c.l.b16 %v534
        %v791 = vunpack.c.l.b16 %v535
        %v792 = vunpack.c.l.b16 %v536
        %v793 = vunpack.c.l.b16 %v537
        %v794 = vunpack.c.l.b16 %v538
        %v795 = vunpack.c.l.b16 %v539
        %v796 = vunpack.c.l.b16 %v540
        %v797 = vunpack.c.l.b16 %v541
        %v798 = vunpack.c.l.b16 %v542
        %v799 = vunpack.c.l.b16 %v543
        %v800 = vunpack.c.l.b16 %v544
        %v801 = vunpack.c.l.b16 %v545
        %v802 = vunpack.c.l.b16 %v546
        %v803 = vunpack.c.l.b16 %v547
        %v804 = vunpack.c.l.b16 %v548
        %v805 = vunpack.c.l.b16 %v549
        %v806 = vunpack.c.l.b16 %v550
        %v807 = vpack.c.b16 %v776, %v775
        %v808 = vpack.c.b16 %v778, %v777
        %v809 = vpack.c.b16 %v780, %v779
        %v810 = vpack.c.b16 %v782, %v781
        %v811 = vpack.c.b16 %v784, %v783
        %v812 = vpack.c.b16 %v786, %v785
        %v813 = vpack.c.b16 %v788, %v787
        %v814 = vpack.c.b16 %v790, %v789
        %v815 = vpack.c.b16 %v792, %v791
        %v816 = vpack.c.b16 %v794, %v793
        %v817 = vpack.c.b16 %v796, %v795
        %v818 = vpack.c.b16 %v798, %v797
        %v819 = vpack.c.b16 %v800, %v799
        %v820 = vpack.c.b16 %v802, %v801
        %v821 = vpack.c.b16 %v804, %v803
        %v822 = vpack.c.b16 %v806, %v805
        %v831 = vunpack.c.l.b16 %v511
        %v832 = vunpack.c.l.b16 %v512
        %v833 = vunpack.c.l.b16 %v513
        %v834 = vunpack.c.l.b16 %v514
        %v835 = vunpack.c.l.b16 %v515
        %v836 = vunpack.c.l.b16 %v516
        %v837 = vunpack.c.l.b16 %v517
        %v838 = vunpack.c.l.b16 %v518
        %v839 = vpack.c.b16 %v832, %v831
        %v840 = vpack.c.b16 %v834, %v833
        %v841 = vpack.c.b16 %v836, %v835
        %v842 = vpack.c.b16 %v838, %v837
        %vm847 = vcmask 523264
        %v849 = vsel %vm847, %v807, 0
        %v852 = vsel %vm847, %v808, 0
        %v855 = vsel %vm847, %v809, 0
        %v858 = vsel %vm847, %v810, 0
        %v861 = vsel %vm847, %v811, 0
        %v864 = vsel %vm847, %v812, 0
        %v867 = vsel %vm847, %v813, 0
        %v870 = vsel %vm847, %v814, 0
        %v873 = vsel %vm847, %v815, 0
        %v876 = vsel %vm847, %v816, 0
        %v879 = vsel %vm847, %v817, 0
        %v882 = vsel %vm847, %v818, 0
        %v885 = vsel %vm847, %v819, 0
        %v888 = vsel %vm847, %v820, 0
        %v891 = vsel %vm847, %v821, 0
        %v894 = vsel %vm847, %v822, 0
        %896 = vmatpush.bf16.msra.mxu0 0
        %897 = vmatpush.bf16.msra.mxu0 0
        %898 = vmatpush.bf16.msra.mxu0 0
        %899 = vmatpush.bf16.msra.mxu0 0
        %900 = vmatpush.bf16.msra.mxu0 %v842
        %901 = vmatpush.bf16.msra.mxu0 %v841
        %902 = vmatpush.bf16.msra.mxu0 %v840
        %903 = vmatpush.bf16.msra.mxu0 %v839
        %904 = vmatmul.bf16.gmra.mxu0 %v849
        %v905 = vpop.f32.mrf.mxu0
        %v906 = vadd.f32 %v586, %v905
        %v907 = vpop.f32.mrf.mxu0
        %v908 = vadd.f32 %v591, %v907
        %909 = vmatmul.bf16.gmra.mxu0 %v852
        %v910 = vpop.f32.mrf.mxu0
        %v911 = vadd.f32 %v596, %v910
        %v912 = vpop.f32.mrf.mxu0
        %v913 = vadd.f32 %v601, %v912
        %914 = vmatmul.bf16.gmra.mxu0 %v855
        %v915 = vpop.f32.mrf.mxu0
        %v916 = vadd.f32 %v606, %v915
        %v917 = vpop.f32.mrf.mxu0
        %v918 = vadd.f32 %v611, %v917
        %919 = vmatmul.bf16.gmra.mxu0 %v858
        %v920 = vpop.f32.mrf.mxu0
        %v921 = vadd.f32 %v616, %v920
        %v922 = vpop.f32.mrf.mxu0
        %v923 = vadd.f32 %v621, %v922
        %924 = vmatmul.bf16.gmra.mxu0 %v861
        %v925 = vpop.f32.mrf.mxu0
        %v926 = vadd.f32 %v626, %v925
        %v927 = vpop.f32.mrf.mxu0
        %v928 = vadd.f32 %v631, %v927
        %929 = vmatmul.bf16.gmra.mxu0 %v864
        %v930 = vpop.f32.mrf.mxu0
        %v931 = vadd.f32 %v636, %v930
        %v932 = vpop.f32.mrf.mxu0
        %v933 = vadd.f32 %v641, %v932
        %934 = vmatmul.bf16.gmra.mxu0 %v867
        %v935 = vpop.f32.mrf.mxu0
        %v936 = vadd.f32 %v646, %v935
        %v937 = vpop.f32.mrf.mxu0
        %v938 = vadd.f32 %v651, %v937
        %939 = vmatmul.bf16.gmra.mxu0 %v870
        %v940 = vpop.f32.mrf.mxu0
        %v941 = vadd.f32 %v656, %v940
        %v942 = vpop.f32.mrf.mxu0
        %v943 = vadd.f32 %v661, %v942
        %944 = vmatmul.bf16.gmra.mxu0 %v873
        %v945 = vpop.f32.mrf.mxu0
        %v946 = vadd.f32 %v666, %v945
        %v947 = vpop.f32.mrf.mxu0
        %v948 = vadd.f32 %v671, %v947
        %949 = vmatmul.bf16.gmra.mxu0 %v876
        %v950 = vpop.f32.mrf.mxu0
        %v951 = vadd.f32 %v676, %v950
        %v952 = vpop.f32.mrf.mxu0
        %v953 = vadd.f32 %v681, %v952
        %954 = vmatmul.bf16.gmra.mxu0 %v879
        %v955 = vpop.f32.mrf.mxu0
        %v956 = vadd.f32 %v686, %v955
        %v957 = vpop.f32.mrf.mxu0
        %v958 = vadd.f32 %v691, %v957
        %959 = vmatmul.bf16.gmra.mxu0 %v882
        %v960 = vpop.f32.mrf.mxu0
        %v961 = vadd.f32 %v696, %v960
        %v962 = vpop.f32.mrf.mxu0
        %v963 = vadd.f32 %v701, %v962
        %964 = vmatmul.bf16.gmra.mxu0 %v885
        %v965 = vpop.f32.mrf.mxu0
        %v966 = vadd.f32 %v706, %v965
        %v967 = vpop.f32.mrf.mxu0
        %v968 = vadd.f32 %v711, %v967
        %969 = vmatmul.bf16.gmra.mxu0 %v888
        %v970 = vpop.f32.mrf.mxu0
        %v971 = vadd.f32 %v716, %v970
        %v972 = vpop.f32.mrf.mxu0
        %v973 = vadd.f32 %v721, %v972
        %974 = vmatmul.bf16.gmra.mxu0 %v891
        %v975 = vpop.f32.mrf.mxu0
        %v976 = vadd.f32 %v726, %v975
        %v977 = vpop.f32.mrf.mxu0
        %v978 = vadd.f32 %v731, %v977
        %979 = vmatmul.bf16.gmra.mxu0 %v894
        %v980 = vpop.f32.mrf.mxu0
        %v981 = vadd.f32 %v736, %v980
        %v982 = vpop.f32.mrf.mxu0
        %v983 = vadd.f32 %v741, %v982
        %984 = vdwg.mxu0
        %v985 = vmax.f32 %v906, 0.0
        %v986 = vmax.f32 %v908, 0.0
        %v987 = vmax.f32 %v911, 0.0
        %v988 = vmax.f32 %v913, 0.0
        %v989 = vmax.f32 %v916, 0.0
        %v990 = vmax.f32 %v918, 0.0
        %v991 = vmax.f32 %v921, 0.0
        %v992 = vmax.f32 %v923, 0.0
        %v993 = vmax.f32 %v926, 0.0
        %v994 = vmax.f32 %v928, 0.0
        %v995 = vmax.f32 %v931, 0.0
        %v996 = vmax.f32 %v933, 0.0
        %v997 = vmax.f32 %v936, 0.0
        %v998 = vmax.f32 %v938, 0.0
        %v999 = vmax.f32 %v941, 0.0
        %v1000 = vmax.f32 %v943, 0.0
        %v1001 = vmax.f32 %v946, 0.0
        %v1002 = vmax.f32 %v948, 0.0
        %v1003 = vmax.f32 %v951, 0.0
        %v1004 = vmax.f32 %v953, 0.0
        %v1005 = vmax.f32 %v956, 0.0
        %v1006 = vmax.f32 %v958, 0.0
        %v1007 = vmax.f32 %v961, 0.0
        %v1008 = vmax.f32 %v963, 0.0
        %v1009 = vmax.f32 %v966, 0.0
        %v1010 = vmax.f32 %v968, 0.0
        %v1011 = vmax.f32 %v971, 0.0
        %v1012 = vmax.f32 %v973, 0.0
        %v1013 = vmax.f32 %v976, 0.0
        %v1014 = vmax.f32 %v978, 0.0
        %v1015 = vmax.f32 %v981, 0.0
        %v1016 = vmax.f32 %v983, 0.0
        %v1017 = vpack.c.bf16 %v986, %v985
        %v1018 = vpack.c.bf16 %v988, %v987
        %v1019 = vpack.c.bf16 %v990, %v989
        %v1020 = vpack.c.bf16 %v992, %v991
        %v1021 = vpack.c.bf16 %v994, %v993
        %v1022 = vpack.c.bf16 %v996, %v995
        %v1023 = vpack.c.bf16 %v998, %v997
        %v1024 = vpack.c.bf16 %v1000, %v999
        %v1025 = vpack.c.bf16 %v1002, %v1001
        %v1026 = vpack.c.bf16 %v1004, %v1003
        %v1027 = vpack.c.bf16 %v1006, %v1005
        %v1028 = vpack.c.bf16 %v1008, %v1007
        %v1029 = vpack.c.bf16 %v1010, %v1009
        %v1030 = vpack.c.bf16 %v1012, %v1011
        %v1031 = vpack.c.bf16 %v1014, %v1013
        %v1032 = vpack.c.bf16 %v1016, %v1015
        %v1033 = vld [vmem:[%s2] sm:$0xff]
        %v1034 = vld [vmem:[%s2 + $0x8] sm:$0xff]
        %v1035 = vld [vmem:[%s2 + $0x10] sm:$0xff]
        %v1036 = vld [vmem:[%s2 + $0x18] sm:$0xff]
        %v1037 = vld [vmem:[%s2 + $0x20] sm:$0xff]
        %v1038 = vld [vmem:[%s2 + $0x28] sm:$0xff]
        %v1039 = vld [vmem:[%s2 + $0x30] sm:$0xff]
        %v1040 = vld [vmem:[%s2 + $0x38] sm:$0xff]
        %v1041 = vld [vmem:[%s2 + $0x40] sm:$0xff]
        %v1042 = vld [vmem:[%s2 + $0x48] sm:$0xff]
        %v1043 = vld [vmem:[%s2 + $0x50] sm:$0xff]
        %v1044 = vld [vmem:[%s2 + $0x58] sm:$0xff]
        %v1045 = vld [vmem:[%s2 + $0x60] sm:$0xff]
        %v1046 = vld [vmem:[%s2 + $0x68] sm:$0xff]
        %v1047 = vld [vmem:[%s2 + $0x70] sm:$0xff]
        %v1048 = vld [vmem:[%s2 + $0x78] sm:$0xff]
        %v1049 = vld [vmem:[%s2 + $0x80] sm:$0xff]
        %v1050 = vld [vmem:[%s2 + $0x88] sm:$0xff]
        %v1051 = vld [vmem:[%s2 + $0x90] sm:$0xff]
        %v1052 = vld [vmem:[%s2 + $0x98] sm:$0xff]
        %v1053 = vld [vmem:[%s2 + $0xa0] sm:$0xff]
        %v1054 = vld [vmem:[%s2 + $0xa8] sm:$0xff]
        %v1055 = vld [vmem:[%s2 + $0xb0] sm:$0xff]
        %v1056 = vld [vmem:[%s2 + $0xb8] sm:$0xff]
        %v1057 = vld [vmem:[%s2 + $0xc0] sm:$0xff]
        %v1058 = vld [vmem:[%s2 + $0xc8] sm:$0xff]
        %v1059 = vld [vmem:[%s2 + $0xd0] sm:$0xff]
        %v1060 = vld [vmem:[%s2 + $0xd8] sm:$0xff]
        %v1061 = vld [vmem:[%s2 + $0xe0] sm:$0xff]
        %v1062 = vld [vmem:[%s2 + $0xe8] sm:$0xff]
        %v1063 = vld [vmem:[%s2 + $0xf0] sm:$0xff]
        %v1064 = vld [vmem:[%s2 + $0xf8] sm:$0xff]
        %v1065 = vld [vmem:[%s2 + $0x100] sm:$0xff]
        %v1066 = vld [vmem:[%s2 + $0x108] sm:$0xff]
        %v1067 = vld [vmem:[%s2 + $0x110] sm:$0xff]
        %v1068 = vld [vmem:[%s2 + $0x118] sm:$0xff]
        %v1069 = vld [vmem:[%s2 + $0x120] sm:$0xff]
        %v1070 = vld [vmem:[%s2 + $0x128] sm:$0xff]
        %v1071 = vld [vmem:[%s2 + $0x130] sm:$0xff]
        %v1072 = vld [vmem:[%s2 + $0x138] sm:$0xff]
        %v1073 = vld [vmem:[%s2 + $0x140] sm:$0xff]
        %v1074 = vld [vmem:[%s2 + $0x148] sm:$0xff]
        %v1075 = vld [vmem:[%s2 + $0x150] sm:$0xff]
        %v1076 = vld [vmem:[%s2 + $0x158] sm:$0xff]
        %v1077 = vld [vmem:[%s2 + $0x160] sm:$0xff]
        %v1078 = vld [vmem:[%s2 + $0x168] sm:$0xff]
        %v1079 = vld [vmem:[%s2 + $0x170] sm:$0xff]
        %v1080 = vld [vmem:[%s2 + $0x178] sm:$0xff]
        %v1081 = vld [vmem:[%s2 + $0x180] sm:$0xff]
        %v1082 = vld [vmem:[%s2 + $0x188] sm:$0xff]
        %v1083 = vld [vmem:[%s2 + $0x190] sm:$0xff]
        %v1084 = vld [vmem:[%s2 + $0x198] sm:$0xff]
        %v1085 = vld [vmem:[%s2 + $0x1a0] sm:$0xff]
        %v1086 = vld [vmem:[%s2 + $0x1a8] sm:$0xff]
        %v1087 = vld [vmem:[%s2 + $0x1b0] sm:$0xff]
        %v1088 = vld [vmem:[%s2 + $0x1b8] sm:$0xff]
        %v1089 = vld [vmem:[%s2 + $0x1c0] sm:$0xff]
        %v1090 = vld [vmem:[%s2 + $0x1c8] sm:$0xff]
        %v1091 = vld [vmem:[%s2 + $0x1d0] sm:$0xff]
        %v1092 = vld [vmem:[%s2 + $0x1d8] sm:$0xff]
        %v1093 = vld [vmem:[%s2 + $0x1e0] sm:$0xff]
        %v1094 = vld [vmem:[%s2 + $0x1e8] sm:$0xff]
        %v1095 = vld [vmem:[%s2 + $0x1f0] sm:$0xff]
        %v1096 = vld [vmem:[%s2 + $0x1f8] sm:$0xff]
        %v1097 = vld [vmem:[%s8] sm:$0xff]
        %v1098 = vld [vmem:[%s8 + $0x8] sm:$0xff]
        %v1099 = vld [vmem:[%s8 + $0x10] sm:$0xff]
        %v1100 = vld [vmem:[%s8 + $0x18] sm:$0xff]
        %v1101 = vld [vmem:[%s8 + $0x20] sm:$0xff]
        %v1102 = vld [vmem:[%s8 + $0x28] sm:$0xff]
        %v1103 = vld [vmem:[%s8 + $0x30] sm:$0xff]
        %v1104 = vld [vmem:[%s8 + $0x38] sm:$0xff]
        %v1105 = vld [vmem:[%s8 + $0x40] sm:$0xff]
        %v1106 = vld [vmem:[%s8 + $0x48] sm:$0xff]
        %v1107 = vld [vmem:[%s8 + $0x50] sm:$0xff]
        %v1108 = vld [vmem:[%s8 + $0x58] sm:$0xff]
        %v1109 = vld [vmem:[%s8 + $0x60] sm:$0xff]
        %v1110 = vld [vmem:[%s8 + $0x68] sm:$0xff]
        %v1111 = vld [vmem:[%s8 + $0x70] sm:$0xff]
        %v1112 = vld [vmem:[%s8 + $0x78] sm:$0xff]
        %v1113 = vld [vmem:[%s8 + $0x80] sm:$0xff]
        %v1114 = vld [vmem:[%s8 + $0x88] sm:$0xff]
        %v1115 = vld [vmem:[%s8 + $0x90] sm:$0xff]
        %v1116 = vld [vmem:[%s8 + $0x98] sm:$0xff]
        %v1117 = vld [vmem:[%s8 + $0xa0] sm:$0xff]
        %v1118 = vld [vmem:[%s8 + $0xa8] sm:$0xff]
        %v1119 = vld [vmem:[%s8 + $0xb0] sm:$0xff]
        %v1120 = vld [vmem:[%s8 + $0xb8] sm:$0xff]
        %v1121 = vld [vmem:[%s8 + $0xc0] sm:$0xff]
        %v1122 = vld [vmem:[%s8 + $0xc8] sm:$0xff]
        %v1123 = vld [vmem:[%s8 + $0xd0] sm:$0xff]
        %v1124 = vld [vmem:[%s8 + $0xd8] sm:$0xff]
        %v1125 = vld [vmem:[%s8 + $0xe0] sm:$0xff]
        %v1126 = vld [vmem:[%s8 + $0xe8] sm:$0xff]
        %v1127 = vld [vmem:[%s8 + $0xf0] sm:$0xff]
        %v1128 = vld [vmem:[%s8 + $0xf8] sm:$0xff]
        %v1129 = vld [vmem:[%s8 + $0x100] sm:$0xff]
        %v1130 = vld [vmem:[%s8 + $0x108] sm:$0xff]
        %v1131 = vld [vmem:[%s8 + $0x110] sm:$0xff]
        %v1132 = vld [vmem:[%s8 + $0x118] sm:$0xff]
        %v1133 = vld [vmem:[%s8 + $0x120] sm:$0xff]
        %v1134 = vld [vmem:[%s8 + $0x128] sm:$0xff]
        %v1135 = vld [vmem:[%s8 + $0x130] sm:$0xff]
        %v1136 = vld [vmem:[%s8 + $0x138] sm:$0xff]
        %v1137 = vld [vmem:[%s8 + $0x140] sm:$0xff]
        %v1138 = vld [vmem:[%s8 + $0x148] sm:$0xff]
        %v1139 = vld [vmem:[%s8 + $0x150] sm:$0xff]
        %v1140 = vld [vmem:[%s8 + $0x158] sm:$0xff]
        %v1141 = vld [vmem:[%s8 + $0x160] sm:$0xff]
        %v1142 = vld [vmem:[%s8 + $0x168] sm:$0xff]
        %v1143 = vld [vmem:[%s8 + $0x170] sm:$0xff]
        %v1144 = vld [vmem:[%s8 + $0x178] sm:$0xff]
        %v1145 = vld [vmem:[%s8 + $0x180] sm:$0xff]
        %v1146 = vld [vmem:[%s8 + $0x188] sm:$0xff]
        %v1147 = vld [vmem:[%s8 + $0x190] sm:$0xff]
        %v1148 = vld [vmem:[%s8 + $0x198] sm:$0xff]
        %v1149 = vld [vmem:[%s8 + $0x1a0] sm:$0xff]
        %v1150 = vld [vmem:[%s8 + $0x1a8] sm:$0xff]
        %v1151 = vld [vmem:[%s8 + $0x1b0] sm:$0xff]
        %v1152 = vld [vmem:[%s8 + $0x1b8] sm:$0xff]
        %v1153 = vld [vmem:[%s8 + $0x1c0] sm:$0xff]
        %v1154 = vld [vmem:[%s8 + $0x1c8] sm:$0xff]
        %v1155 = vld [vmem:[%s8 + $0x1d0] sm:$0xff]
        %v1156 = vld [vmem:[%s8 + $0x1d8] sm:$0xff]
        %v1157 = vld [vmem:[%s8 + $0x1e0] sm:$0xff]
        %v1158 = vld [vmem:[%s8 + $0x1e8] sm:$0xff]
        %v1159 = vld [vmem:[%s8 + $0x1f0] sm:$0xff]
        %v1160 = vld [vmem:[%s8 + $0x1f8] sm:$0xff]
        %1162 = vset.pattern.permute.xlu0 0
        %1163 = vperm.xlu0 %1162, %v1097
        %v1164 = vpop.permute.xlu0 %1163
        %1167 = vset.pattern.permute.xlu0 0
        %1168 = vperm.xlu0 %1167, %v1098
        %v1169 = vpop.permute.xlu0 %1168
        %1172 = vset.pattern.permute.xlu0 0
        %1173 = vperm.xlu0 %1172, %v1099
        %v1174 = vpop.permute.xlu0 %1173
        %1177 = vset.pattern.permute.xlu0 0
        %1178 = vperm.xlu0 %1177, %v1100
        %v1179 = vpop.permute.xlu0 %1178
        %1182 = vset.pattern.permute.xlu0 0
        %1183 = vperm.xlu0 %1182, %v1101
        %v1184 = vpop.permute.xlu0 %1183
        %1187 = vset.pattern.permute.xlu0 0
        %1188 = vperm.xlu0 %1187, %v1102
        %v1189 = vpop.permute.xlu0 %1188
        %1192 = vset.pattern.permute.xlu0 0
        %1193 = vperm.xlu0 %1192, %v1103
        %v1194 = vpop.permute.xlu0 %1193
        %1197 = vset.pattern.permute.xlu0 0
        %1198 = vperm.xlu0 %1197, %v1104
        %v1199 = vpop.permute.xlu0 %1198
        %1202 = vset.pattern.permute.xlu0 0
        %1203 = vperm.xlu0 %1202, %v1105
        %v1204 = vpop.permute.xlu0 %1203
        %1207 = vset.pattern.permute.xlu0 0
        %1208 = vperm.xlu0 %1207, %v1106
        %v1209 = vpop.permute.xlu0 %1208
        %1212 = vset.pattern.permute.xlu0 0
        %1213 = vperm.xlu0 %1212, %v1107
        %v1214 = vpop.permute.xlu0 %1213
        %1217 = vset.pattern.permute.xlu0 0
        %1218 = vperm.xlu0 %1217, %v1108
        %v1219 = vpop.permute.xlu0 %1218
        %1222 = vset.pattern.permute.xlu0 0
        %1223 = vperm.xlu0 %1222, %v1109
        %v1224 = vpop.permute.xlu0 %1223
        %1227 = vset.pattern.permute.xlu0 0
        %1228 = vperm.xlu0 %1227, %v1110
        %v1229 = vpop.permute.xlu0 %1228
        %1232 = vset.pattern.permute.xlu0 0
        %1233 = vperm.xlu0 %1232, %v1111
        %v1234 = vpop.permute.xlu0 %1233
        %1237 = vset.pattern.permute.xlu0 0
        %1238 = vperm.xlu0 %1237, %v1112
        %v1239 = vpop.permute.xlu0 %1238
        %1242 = vset.pattern.permute.xlu0 0
        %1243 = vperm.xlu0 %1242, %v1113
        %v1244 = vpop.permute.xlu0 %1243
        %1247 = vset.pattern.permute.xlu0 0
        %1248 = vperm.xlu0 %1247, %v1114
        %v1249 = vpop.permute.xlu0 %1248
        %1252 = vset.pattern.permute.xlu0 0
        %1253 = vperm.xlu0 %1252, %v1115
        %v1254 = vpop.permute.xlu0 %1253
        %1257 = vset.pattern.permute.xlu0 0
        %1258 = vperm.xlu0 %1257, %v1116
        %v1259 = vpop.permute.xlu0 %1258
        %1262 = vset.pattern.permute.xlu0 0
        %1263 = vperm.xlu0 %1262, %v1117
        %v1264 = vpop.permute.xlu0 %1263
        %1267 = vset.pattern.permute.xlu0 0
        %1268 = vperm.xlu0 %1267, %v1118
        %v1269 = vpop.permute.xlu0 %1268
        %1272 = vset.pattern.permute.xlu0 0
        %1273 = vperm.xlu0 %1272, %v1119
        %v1274 = vpop.permute.xlu0 %1273
        %1277 = vset.pattern.permute.xlu0 0
        %1278 = vperm.xlu0 %1277, %v1120
        %v1279 = vpop.permute.xlu0 %1278
        %1282 = vset.pattern.permute.xlu0 0
        %1283 = vperm.xlu0 %1282, %v1121
        %v1284 = vpop.permute.xlu0 %1283
        %1287 = vset.pattern.permute.xlu0 0
        %1288 = vperm.xlu0 %1287, %v1122
        %v1289 = vpop.permute.xlu0 %1288
        %1292 = vset.pattern.permute.xlu0 0
        %1293 = vperm.xlu0 %1292, %v1123
        %v1294 = vpop.permute.xlu0 %1293
        %1297 = vset.pattern.permute.xlu0 0
        %1298 = vperm.xlu0 %1297, %v1124
        %v1299 = vpop.permute.xlu0 %1298
        %1302 = vset.pattern.permute.xlu0 0
        %1303 = vperm.xlu0 %1302, %v1125
        %v1304 = vpop.permute.xlu0 %1303
        %1307 = vset.pattern.permute.xlu0 0
        %1308 = vperm.xlu0 %1307, %v1126
        %v1309 = vpop.permute.xlu0 %1308
        %1312 = vset.pattern.permute.xlu0 0
        %1313 = vperm.xlu0 %1312, %v1127
        %v1314 = vpop.permute.xlu0 %1313
        %1317 = vset.pattern.permute.xlu0 0
        %1318 = vperm.xlu0 %1317, %v1128
        %v1319 = vpop.permute.xlu0 %1318
        %1322 = vset.pattern.permute.xlu0 0
        %1323 = vperm.xlu0 %1322, %v1129
        %v1324 = vpop.permute.xlu0 %1323
        %1327 = vset.pattern.permute.xlu0 0
        %1328 = vperm.xlu0 %1327, %v1130
        %v1329 = vpop.permute.xlu0 %1328
        %1332 = vset.pattern.permute.xlu0 0
        %1333 = vperm.xlu0 %1332, %v1131
        %v1334 = vpop.permute.xlu0 %1333
        %1337 = vset.pattern.permute.xlu0 0
        %1338 = vperm.xlu0 %1337, %v1132
        %v1339 = vpop.permute.xlu0 %1338
        %1342 = vset.pattern.permute.xlu0 0
        %1343 = vperm.xlu0 %1342, %v1133
        %v1344 = vpop.permute.xlu0 %1343
        %1347 = vset.pattern.permute.xlu0 0
        %1348 = vperm.xlu0 %1347, %v1134
        %v1349 = vpop.permute.xlu0 %1348
        %1352 = vset.pattern.permute.xlu0 0
        %1353 = vperm.xlu0 %1352, %v1135
        %v1354 = vpop.permute.xlu0 %1353
        %1357 = vset.pattern.permute.xlu0 0
        %1358 = vperm.xlu0 %1357, %v1136
        %v1359 = vpop.permute.xlu0 %1358
        %1362 = vset.pattern.permute.xlu0 0
        %1363 = vperm.xlu0 %1362, %v1137
        %v1364 = vpop.permute.xlu0 %1363
        %1367 = vset.pattern.permute.xlu0 0
        %1368 = vperm.xlu0 %1367, %v1138
        %v1369 = vpop.permute.xlu0 %1368
        %1372 = vset.pattern.permute.xlu0 0
        %1373 = vperm.xlu0 %1372, %v1139
        %v1374 = vpop.permute.xlu0 %1373
        %1377 = vset.pattern.permute.xlu0 0
        %1378 = vperm.xlu0 %1377, %v1140
        %v1379 = vpop.permute.xlu0 %1378
        %1382 = vset.pattern.permute.xlu0 0
        %1383 = vperm.xlu0 %1382, %v1141
        %v1384 = vpop.permute.xlu0 %1383
        %1387 = vset.pattern.permute.xlu0 0
        %1388 = vperm.xlu0 %1387, %v1142
        %v1389 = vpop.permute.xlu0 %1388
        %1392 = vset.pattern.permute.xlu0 0
        %1393 = vperm.xlu0 %1392, %v1143
        %v1394 = vpop.permute.xlu0 %1393
        %1397 = vset.pattern.permute.xlu0 0
        %1398 = vperm.xlu0 %1397, %v1144
        %v1399 = vpop.permute.xlu0 %1398
        %1402 = vset.pattern.permute.xlu0 0
        %1403 = vperm.xlu0 %1402, %v1145
        %v1404 = vpop.permute.xlu0 %1403
        %1407 = vset.pattern.permute.xlu0 0
        %1408 = vperm.xlu0 %1407, %v1146
        %v1409 = vpop.permute.xlu0 %1408
        %1412 = vset.pattern.permute.xlu0 0
        %1413 = vperm.xlu0 %1412, %v1147
        %v1414 = vpop.permute.xlu0 %1413
        %1417 = vset.pattern.permute.xlu0 0
        %1418 = vperm.xlu0 %1417, %v1148
        %v1419 = vpop.permute.xlu0 %1418
        %1422 = vset.pattern.permute.xlu0 0
        %1423 = vperm.xlu0 %1422, %v1149
        %v1424 = vpop.permute.xlu0 %1423
        %1427 = vset.pattern.permute.xlu0 0
        %1428 = vperm.xlu0 %1427, %v1150
        %v1429 = vpop.permute.xlu0 %1428
        %1432 = vset.pattern.permute.xlu0 0
        %1433 = vperm.xlu0 %1432, %v1151
        %v1434 = vpop.permute.xlu0 %1433
        %1437 = vset.pattern.permute.xlu0 0
        %1438 = vperm.xlu0 %1437, %v1152
        %v1439 = vpop.permute.xlu0 %1438
        %1442 = vset.pattern.permute.xlu0 0
        %1443 = vperm.xlu0 %1442, %v1153
        %v1444 = vpop.permute.xlu0 %1443
        %1447 = vset.pattern.permute.xlu0 0
        %1448 = vperm.xlu0 %1447, %v1154
        %v1449 = vpop.permute.xlu0 %1448
        %1452 = vset.pattern.permute.xlu0 0
        %1453 = vperm.xlu0 %1452, %v1155
        %v1454 = vpop.permute.xlu0 %1453
        %1457 = vset.pattern.permute.xlu0 0
        %1458 = vperm.xlu0 %1457, %v1156
        %v1459 = vpop.permute.xlu0 %1458
        %1462 = vset.pattern.permute.xlu0 0
        %1463 = vperm.xlu0 %1462, %v1157
        %v1464 = vpop.permute.xlu0 %1463
        %1467 = vset.pattern.permute.xlu0 0
        %1468 = vperm.xlu0 %1467, %v1158
        %v1469 = vpop.permute.xlu0 %1468
        %1472 = vset.pattern.permute.xlu0 0
        %1473 = vperm.xlu0 %1472, %v1159
        %v1474 = vpop.permute.xlu0 %1473
        %1477 = vset.pattern.permute.xlu0 0
        %1478 = vperm.xlu0 %1477, %v1160
        %v1479 = vpop.permute.xlu0 %1478
        %v1545 = vunpack.c.l.b16 %v1033
        %v1546 = vunpack.c.h.b16 %v1033
        %v1547 = vunpack.c.l.b16 %v1034
        %v1548 = vunpack.c.h.b16 %v1034
        %v1549 = vunpack.c.l.b16 %v1035
        %v1550 = vunpack.c.h.b16 %v1035
        %v1551 = vunpack.c.l.b16 %v1036
        %v1552 = vunpack.c.h.b16 %v1036
        %v1553 = vunpack.c.l.b16 %v1037
        %v1554 = vunpack.c.h.b16 %v1037
        %v1555 = vunpack.c.l.b16 %v1038
        %v1556 = vunpack.c.h.b16 %v1038
        %v1557 = vunpack.c.l.b16 %v1039
        %v1558 = vunpack.c.h.b16 %v1039
        %v1559 = vunpack.c.l.b16 %v1040
        %v1560 = vunpack.c.h.b16 %v1040
        %v1561 = vunpack.c.l.b16 %v1041
        %v1562 = vunpack.c.h.b16 %v1041
        %v1563 = vunpack.c.l.b16 %v1042
        %v1564 = vunpack.c.h.b16 %v1042
        %v1565 = vunpack.c.l.b16 %v1043
        %v1566 = vunpack.c.h.b16 %v1043
        %v1567 = vunpack.c.l.b16 %v1044
        %v1568 = vunpack.c.h.b16 %v1044
        %v1569 = vunpack.c.l.b16 %v1045
        %v1570 = vunpack.c.h.b16 %v1045
        %v1571 = vunpack.c.l.b16 %v1046
        %v1572 = vunpack.c.h.b16 %v1046
        %v1573 = vunpack.c.l.b16 %v1047
        %v1574 = vunpack.c.h.b16 %v1047
        %v1575 = vunpack.c.l.b16 %v1048
        %v1576 = vunpack.c.h.b16 %v1048
        %v1577 = vunpack.c.l.b16 %v1049
        %v1578 = vunpack.c.h.b16 %v1049
        %v1579 = vunpack.c.l.b16 %v1050
        %v1580 = vunpack.c.h.b16 %v1050
        %v1581 = vunpack.c.l.b16 %v1051
        %v1582 = vunpack.c.h.b16 %v1051
        %v1583 = vunpack.c.l.b16 %v1052
        %v1584 = vunpack.c.h.b16 %v1052
        %v1585 = vunpack.c.l.b16 %v1053
        %v1586 = vunpack.c.h.b16 %v1053
        %v1587 = vunpack.c.l.b16 %v1054
        %v1588 = vunpack.c.h.b16 %v1054
        %v1589 = vunpack.c.l.b16 %v1055
        %v1590 = vunpack.c.h.b16 %v1055
        %v1591 = vunpack.c.l.b16 %v1056
        %v1592 = vunpack.c.h.b16 %v1056
        %v1593 = vunpack.c.l.b16 %v1057
        %v1594 = vunpack.c.h.b16 %v1057
        %v1595 = vunpack.c.l.b16 %v1058
        %v1596 = vunpack.c.h.b16 %v1058
        %v1597 = vunpack.c.l.b16 %v1059
        %v1598 = vunpack.c.h.b16 %v1059
        %v1599 = vunpack.c.l.b16 %v1060
        %v1600 = vunpack.c.h.b16 %v1060
        %v1601 = vunpack.c.l.b16 %v1061
        %v1602 = vunpack.c.h.b16 %v1061
        %v1603 = vunpack.c.l.b16 %v1062
        %v1604 = vunpack.c.h.b16 %v1062
        %v1605 = vunpack.c.l.b16 %v1063
        %v1606 = vunpack.c.h.b16 %v1063
        %v1607 = vunpack.c.l.b16 %v1064
        %v1608 = vunpack.c.h.b16 %v1064
        %v1609 = vunpack.c.l.b16 %v1065
        %v1610 = vunpack.c.h.b16 %v1065
        %v1611 = vunpack.c.l.b16 %v1066
        %v1612 = vunpack.c.h.b16 %v1066
        %v1613 = vunpack.c.l.b16 %v1067
        %v1614 = vunpack.c.h.b16 %v1067
        %v1615 = vunpack.c.l.b16 %v1068
        %v1616 = vunpack.c.h.b16 %v1068
        %v1617 = vunpack.c.l.b16 %v1069
        %v1618 = vunpack.c.h.b16 %v1069
        %v1619 = vunpack.c.l.b16 %v1070
        %v1620 = vunpack.c.h.b16 %v1070
        %v1621 = vunpack.c.l.b16 %v1071
        %v1622 = vunpack.c.h.b16 %v1071
        %v1623 = vunpack.c.l.b16 %v1072
        %v1624 = vunpack.c.h.b16 %v1072
        %v1625 = vunpack.c.l.b16 %v1073
        %v1626 = vunpack.c.h.b16 %v1073
        %v1627 = vunpack.c.l.b16 %v1074
        %v1628 = vunpack.c.h.b16 %v1074
        %v1629 = vunpack.c.l.b16 %v1075
        %v1630 = vunpack.c.h.b16 %v1075
        %v1631 = vunpack.c.l.b16 %v1076
        %v1632 = vunpack.c.h.b16 %v1076
        %v1633 = vunpack.c.l.b16 %v1077
        %v1634 = vunpack.c.h.b16 %v1077
        %v1635 = vunpack.c.l.b16 %v1078
        %v1636 = vunpack.c.h.b16 %v1078
        %v1637 = vunpack.c.l.b16 %v1079
        %v1638 = vunpack.c.h.b16 %v1079
        %v1639 = vunpack.c.l.b16 %v1080
        %v1640 = vunpack.c.h.b16 %v1080
        %v1641 = vunpack.c.l.b16 %v1081
        %v1642 = vunpack.c.h.b16 %v1081
        %v1643 = vunpack.c.l.b16 %v1082
        %v1644 = vunpack.c.h.b16 %v1082
        %v1645 = vunpack.c.l.b16 %v1083
        %v1646 = vunpack.c.h.b16 %v1083
        %v1647 = vunpack.c.l.b16 %v1084
        %v1648 = vunpack.c.h.b16 %v1084
        %v1649 = vunpack.c.l.b16 %v1085
        %v1650 = vunpack.c.h.b16 %v1085
        %v1651 = vunpack.c.l.b16 %v1086
        %v1652 = vunpack.c.h.b16 %v1086
        %v1653 = vunpack.c.l.b16 %v1087
        %v1654 = vunpack.c.h.b16 %v1087
        %v1655 = vunpack.c.l.b16 %v1088
        %v1656 = vunpack.c.h.b16 %v1088
        %v1657 = vunpack.c.l.b16 %v1089
        %v1658 = vunpack.c.h.b16 %v1089
        %v1659 = vunpack.c.l.b16 %v1090
        %v1660 = vunpack.c.h.b16 %v1090
        %v1661 = vunpack.c.l.b16 %v1091
        %v1662 = vunpack.c.h.b16 %v1091
        %v1663 = vunpack.c.l.b16 %v1092
        %v1664 = vunpack.c.h.b16 %v1092
        %v1665 = vunpack.c.l.b16 %v1093
        %v1666 = vunpack.c.h.b16 %v1093
        %v1667 = vunpack.c.l.b16 %v1094
        %v1668 = vunpack.c.h.b16 %v1094
        %v1669 = vunpack.c.l.b16 %v1095
        %v1670 = vunpack.c.h.b16 %v1095
        %v1671 = vunpack.c.l.b16 %v1096
        %v1672 = vunpack.c.h.b16 %v1096
        %v1673 = vpack.c.b16 %v1547, %v1545
        %v1674 = vpack.c.b16 %v1548, %v1546
        %v1675 = vpack.c.b16 %v1551, %v1549
        %v1676 = vpack.c.b16 %v1552, %v1550
        %v1677 = vpack.c.b16 %v1555, %v1553
        %v1678 = vpack.c.b16 %v1556, %v1554
        %v1679 = vpack.c.b16 %v1559, %v1557
        %v1680 = vpack.c.b16 %v1560, %v1558
        %v1681 = vpack.c.b16 %v1563, %v1561
        %v1682 = vpack.c.b16 %v1564, %v1562
        %v1683 = vpack.c.b16 %v1567, %v1565
        %v1684 = vpack.c.b16 %v1568, %v1566
        %v1685 = vpack.c.b16 %v1571, %v1569
        %v1686 = vpack.c.b16 %v1572, %v1570
        %v1687 = vpack.c.b16 %v1575, %v1573
        %v1688 = vpack.c.b16 %v1576, %v1574
        %v1689 = vpack.c.b16 %v1579, %v1577
        %v1690 = vpack.c.b16 %v1580, %v1578
        %v1691 = vpack.c.b16 %v1583, %v1581
        %v1692 = vpack.c.b16 %v1584, %v1582
        %v1693 = vpack.c.b16 %v1587, %v1585
        %v1694 = vpack.c.b16 %v1588, %v1586
        %v1695 = vpack.c.b16 %v1591, %v1589
        %v1696 = vpack.c.b16 %v1592, %v1590
        %v1697 = vpack.c.b16 %v1595, %v1593
        %v1698 = vpack.c.b16 %v1596, %v1594
        %v1699 = vpack.c.b16 %v1599, %v1597
        %v1700 = vpack.c.b16 %v1600, %v1598
        %v1701 = vpack.c.b16 %v1603, %v1601
        %v1702 = vpack.c.b16 %v1604, %v1602
        %v1703 = vpack.c.b16 %v1607, %v1605
        %v1704 = vpack.c.b16 %v1608, %v1606
        %v1705 = vpack.c.b16 %v1611, %v1609
        %v1706 = vpack.c.b16 %v1612, %v1610
        %v1707 = vpack.c.b16 %v1615, %v1613
        %v1708 = vpack.c.b16 %v1616, %v1614
        %v1709 = vpack.c.b16 %v1619, %v1617
        %v1710 = vpack.c.b16 %v1620, %v1618
        %v1711 = vpack.c.b16 %v1623, %v1621
        %v1712 = vpack.c.b16 %v1624, %v1622
        %v1713 = vpack.c.b16 %v1627, %v1625
        %v1714 = vpack.c.b16 %v1628, %v1626
        %v1715 = vpack.c.b16 %v1631, %v1629
        %v1716 = vpack.c.b16 %v1632, %v1630
        %v1717 = vpack.c.b16 %v1635, %v1633
        %v1718 = vpack.c.b16 %v1636, %v1634
        %v1719 = vpack.c.b16 %v1639, %v1637
        %v1720 = vpack.c.b16 %v1640, %v1638
        %v1721 = vpack.c.b16 %v1643, %v1641
        %v1722 = vpack.c.b16 %v1644, %v1642
        %v1723 = vpack.c.b16 %v1647, %v1645
        %v1724 = vpack.c.b16 %v1648, %v1646
        %v1725 = vpack.c.b16 %v1651, %v1649
        %v1726 = vpack.c.b16 %v1652, %v1650
        %v1727 = vpack.c.b16 %v1655, %v1653
        %v1728 = vpack.c.b16 %v1656, %v1654
        %v1729 = vpack.c.b16 %v1659, %v1657
        %v1730 = vpack.c.b16 %v1660, %v1658
        %v1731 = vpack.c.b16 %v1663, %v1661
        %v1732 = vpack.c.b16 %v1664, %v1662
        %v1733 = vpack.c.b16 %v1667, %v1665
        %v1734 = vpack.c.b16 %v1668, %v1666
        %v1735 = vpack.c.b16 %v1671, %v1669
        %v1736 = vpack.c.b16 %v1672, %v1670
        %1801 = vmatpush.bf16.msra.mxu0 %v1024
        %1802 = vmatpush.bf16.msra.mxu0 %v1023
        %1803 = vmatpush.bf16.msra.mxu0 %v1022
        %1804 = vmatpush.bf16.msra.mxu0 %v1021
        %1805 = vmatpush.bf16.msra.mxu0 %v1020
        %1806 = vmatpush.bf16.msra.mxu0 %v1019
        %1807 = vmatpush.bf16.msra.mxu0 %v1018
        %1808 = vmatpush.bf16.msra.mxu0 %v1017
        %1809 = vmatmul.bf16.gmra.mxu0 %v1673
        %v1810 = vpop.f32.mrf.mxu0
        %v1811 = vadd.f32 %v1164, %v1810
        %v1812 = vpop.f32.mrf.mxu0
        %v1813 = vadd.f32 %v1169, %v1812
        %1814 = vmatmul.bf16.gmra.mxu0 %v1675
        %v1815 = vpop.f32.mrf.mxu0
        %v1816 = vadd.f32 %v1174, %v1815
        %v1817 = vpop.f32.mrf.mxu0
        %v1818 = vadd.f32 %v1179, %v1817
        %1819 = vmatmul.bf16.gmra.mxu0 %v1677
        %v1820 = vpop.f32.mrf.mxu0
        %v1821 = vadd.f32 %v1184, %v1820
        %v1822 = vpop.f32.mrf.mxu0
        %v1823 = vadd.f32 %v1189, %v1822
        %1824 = vmatmul.bf16.gmra.mxu0 %v1679
        %v1825 = vpop.f32.mrf.mxu0
        %v1826 = vadd.f32 %v1194, %v1825
        %v1827 = vpop.f32.mrf.mxu0
        %v1828 = vadd.f32 %v1199, %v1827
        %1829 = vmatmul.bf16.gmra.mxu0 %v1681
        %v1830 = vpop.f32.mrf.mxu0
        %v1831 = vadd.f32 %v1204, %v1830
        %v1832 = vpop.f32.mrf.mxu0
        %v1833 = vadd.f32 %v1209, %v1832
        %1834 = vmatmul.bf16.gmra.mxu0 %v1683
        %v1835 = vpop.f32.mrf.mxu0
        %v1836 = vadd.f32 %v1214, %v1835
        %v1837 = vpop.f32.mrf.mxu0
        %v1838 = vadd.f32 %v1219, %v1837
        %1839 = vmatmul.bf16.gmra.mxu0 %v1685
        %v1840 = vpop.f32.mrf.mxu0
        %v1841 = vadd.f32 %v1224, %v1840
        %v1842 = vpop.f32.mrf.mxu0
        %v1843 = vadd.f32 %v1229, %v1842
        %1844 = vmatmul.bf16.gmra.mxu0 %v1687
        %v1845 = vpop.f32.mrf.mxu0
        %v1846 = vadd.f32 %v1234, %v1845
        %v1847 = vpop.f32.mrf.mxu0
        %v1848 = vadd.f32 %v1239, %v1847
        %1849 = vmatmul.bf16.gmra.mxu0 %v1689
        %v1850 = vpop.f32.mrf.mxu0
        %v1851 = vadd.f32 %v1244, %v1850
        %v1852 = vpop.f32.mrf.mxu0
        %v1853 = vadd.f32 %v1249, %v1852
        %1854 = vmatmul.bf16.gmra.mxu0 %v1691
        %v1855 = vpop.f32.mrf.mxu0
        %v1856 = vadd.f32 %v1254, %v1855
        %v1857 = vpop.f32.mrf.mxu0
        %v1858 = vadd.f32 %v1259, %v1857
        %1859 = vmatmul.bf16.gmra.mxu0 %v1693
        %v1860 = vpop.f32.mrf.mxu0
        %v1861 = vadd.f32 %v1264, %v1860
        %v1862 = vpop.f32.mrf.mxu0
        %v1863 = vadd.f32 %v1269, %v1862
        %1864 = vmatmul.bf16.gmra.mxu0 %v1695
        %v1865 = vpop.f32.mrf.mxu0
        %v1866 = vadd.f32 %v1274, %v1865
        %v1867 = vpop.f32.mrf.mxu0
        %v1868 = vadd.f32 %v1279, %v1867
        %1869 = vmatmul.bf16.gmra.mxu0 %v1697
        %v1870 = vpop.f32.mrf.mxu0
        %v1871 = vadd.f32 %v1284, %v1870
        %v1872 = vpop.f32.mrf.mxu0
        %v1873 = vadd.f32 %v1289, %v1872
        %1874 = vmatmul.bf16.gmra.mxu0 %v1699
        %v1875 = vpop.f32.mrf.mxu0
        %v1876 = vadd.f32 %v1294, %v1875
        %v1877 = vpop.f32.mrf.mxu0
        %v1878 = vadd.f32 %v1299, %v1877
        %1879 = vmatmul.bf16.gmra.mxu0 %v1701
        %v1880 = vpop.f32.mrf.mxu0
        %v1881 = vadd.f32 %v1304, %v1880
        %v1882 = vpop.f32.mrf.mxu0
        %v1883 = vadd.f32 %v1309, %v1882
        %1884 = vmatmul.bf16.gmra.mxu0 %v1703
        %v1885 = vpop.f32.mrf.mxu0
        %v1886 = vadd.f32 %v1314, %v1885
        %v1887 = vpop.f32.mrf.mxu0
        %v1888 = vadd.f32 %v1319, %v1887
        %1889 = vmatmul.bf16.gmra.mxu0 %v1705
        %v1890 = vpop.f32.mrf.mxu0
        %v1891 = vadd.f32 %v1324, %v1890
        %v1892 = vpop.f32.mrf.mxu0
        %v1893 = vadd.f32 %v1329, %v1892
        %1894 = vmatmul.bf16.gmra.mxu0 %v1707
        %v1895 = vpop.f32.mrf.mxu0
        %v1896 = vadd.f32 %v1334, %v1895
        %v1897 = vpop.f32.mrf.mxu0
        %v1898 = vadd.f32 %v1339, %v1897
        %1899 = vmatmul.bf16.gmra.mxu0 %v1709
        %v1900 = vpop.f32.mrf.mxu0
        %v1901 = vadd.f32 %v1344, %v1900
        %v1902 = vpop.f32.mrf.mxu0
        %v1903 = vadd.f32 %v1349, %v1902
        %1904 = vmatmul.bf16.gmra.mxu0 %v1711
        %v1905 = vpop.f32.mrf.mxu0
        %v1906 = vadd.f32 %v1354, %v1905
        %v1907 = vpop.f32.mrf.mxu0
        %v1908 = vadd.f32 %v1359, %v1907
        %1909 = vmatmul.bf16.gmra.mxu0 %v1713
        %v1910 = vpop.f32.mrf.mxu0
        %v1911 = vadd.f32 %v1364, %v1910
        %v1912 = vpop.f32.mrf.mxu0
        %v1913 = vadd.f32 %v1369, %v1912
        %1914 = vmatmul.bf16.gmra.mxu0 %v1715
        %v1915 = vpop.f32.mrf.mxu0
        %v1916 = vadd.f32 %v1374, %v1915
        %v1917 = vpop.f32.mrf.mxu0
        %v1918 = vadd.f32 %v1379, %v1917
        %1919 = vmatmul.bf16.gmra.mxu0 %v1717
        %v1920 = vpop.f32.mrf.mxu0
        %v1921 = vadd.f32 %v1384, %v1920
        %v1922 = vpop.f32.mrf.mxu0
        %v1923 = vadd.f32 %v1389, %v1922
        %1924 = vmatmul.bf16.gmra.mxu0 %v1719
        %v1925 = vpop.f32.mrf.mxu0
        %v1926 = vadd.f32 %v1394, %v1925
        %v1927 = vpop.f32.mrf.mxu0
        %v1928 = vadd.f32 %v1399, %v1927
        %1929 = vmatmul.bf16.gmra.mxu0 %v1721
        %v1930 = vpop.f32.mrf.mxu0
        %v1931 = vadd.f32 %v1404, %v1930
        %v1932 = vpop.f32.mrf.mxu0
        %v1933 = vadd.f32 %v1409, %v1932
        %1934 = vmatmul.bf16.gmra.mxu0 %v1723
        %v1935 = vpop.f32.mrf.mxu0
        %v1936 = vadd.f32 %v1414, %v1935
        %v1937 = vpop.f32.mrf.mxu0
        %v1938 = vadd.f32 %v1419, %v1937
        %1939 = vmatmul.bf16.gmra.mxu0 %v1725
        %v1940 = vpop.f32.mrf.mxu0
        %v1941 = vadd.f32 %v1424, %v1940
        %v1942 = vpop.f32.mrf.mxu0
        %v1943 = vadd.f32 %v1429, %v1942
        %1944 = vmatmul.bf16.gmra.mxu0 %v1727
        %v1945 = vpop.f32.mrf.mxu0
        %v1946 = vadd.f32 %v1434, %v1945
        %v1947 = vpop.f32.mrf.mxu0
        %v1948 = vadd.f32 %v1439, %v1947
        %1949 = vmatmul.bf16.gmra.mxu0 %v1729
        %v1950 = vpop.f32.mrf.mxu0
        %v1951 = vadd.f32 %v1444, %v1950
        %v1952 = vpop.f32.mrf.mxu0
        %v1953 = vadd.f32 %v1449, %v1952
        %1954 = vmatmul.bf16.gmra.mxu0 %v1731
        %v1955 = vpop.f32.mrf.mxu0
        %v1956 = vadd.f32 %v1454, %v1955
        %v1957 = vpop.f32.mrf.mxu0
        %v1958 = vadd.f32 %v1459, %v1957
        %1959 = vmatmul.bf16.gmra.mxu0 %v1733
        %v1960 = vpop.f32.mrf.mxu0
        %v1961 = vadd.f32 %v1464, %v1960
        %v1962 = vpop.f32.mrf.mxu0
        %v1963 = vadd.f32 %v1469, %v1962
        %1964 = vmatmul.bf16.gmra.mxu0 %v1735
        %v1965 = vpop.f32.mrf.mxu0
        %v1966 = vadd.f32 %v1474, %v1965
        %v1967 = vpop.f32.mrf.mxu0
        %v1968 = vadd.f32 %v1479, %v1967
        %1969 = vdwg.mxu0
        %1970 = vmatpush.bf16.msra.mxu0 %v1032
        %1971 = vmatpush.bf16.msra.mxu0 %v1031
        %1972 = vmatpush.bf16.msra.mxu0 %v1030
        %1973 = vmatpush.bf16.msra.mxu0 %v1029
        %1974 = vmatpush.bf16.msra.mxu0 %v1028
        %1975 = vmatpush.bf16.msra.mxu0 %v1027
        %1976 = vmatpush.bf16.msra.mxu0 %v1026
        %1977 = vmatpush.bf16.msra.mxu0 %v1025
        %1978 = vmatmul.bf16.gmra.mxu0 %v1674
        %v1979 = vpop.f32.mrf.mxu0
        %v1980 = vadd.f32 %v1811, %v1979
        %v1981 = vpop.f32.mrf.mxu0
        %v1982 = vadd.f32 %v1813, %v1981
        %1983 = vmatmul.bf16.gmra.mxu0 %v1676
        %v1984 = vpop.f32.mrf.mxu0
        %v1985 = vadd.f32 %v1816, %v1984
        %v1986 = vpop.f32.mrf.mxu0
        %v1987 = vadd.f32 %v1818, %v1986
        %1988 = vmatmul.bf16.gmra.mxu0 %v1678
        %v1989 = vpop.f32.mrf.mxu0
        %v1990 = vadd.f32 %v1821, %v1989
        %v1991 = vpop.f32.mrf.mxu0
        %v1992 = vadd.f32 %v1823, %v1991
        %1993 = vmatmul.bf16.gmra.mxu0 %v1680
        %v1994 = vpop.f32.mrf.mxu0
        %v1995 = vadd.f32 %v1826, %v1994
        %v1996 = vpop.f32.mrf.mxu0
        %v1997 = vadd.f32 %v1828, %v1996
        %1998 = vmatmul.bf16.gmra.mxu0 %v1682
        %v1999 = vpop.f32.mrf.mxu0
        %v2000 = vadd.f32 %v1831, %v1999
        %v2001 = vpop.f32.mrf.mxu0
        %v2002 = vadd.f32 %v1833, %v2001
        %2003 = vmatmul.bf16.gmra.mxu0 %v1684
        %v2004 = vpop.f32.mrf.mxu0
        %v2005 = vadd.f32 %v1836, %v2004
        %v2006 = vpop.f32.mrf.mxu0
        %v2007 = vadd.f32 %v1838, %v2006
        %2008 = vmatmul.bf16.gmra.mxu0 %v1686
        %v2009 = vpop.f32.mrf.mxu0
        %v2010 = vadd.f32 %v1841, %v2009
        %v2011 = vpop.f32.mrf.mxu0
        %v2012 = vadd.f32 %v1843, %v2011
        %2013 = vmatmul.bf16.gmra.mxu0 %v1688
        %v2014 = vpop.f32.mrf.mxu0
        %v2015 = vadd.f32 %v1846, %v2014
        %v2016 = vpop.f32.mrf.mxu0
        %v2017 = vadd.f32 %v1848, %v2016
        %2018 = vmatmul.bf16.gmra.mxu0 %v1690
        %v2019 = vpop.f32.mrf.mxu0
        %v2020 = vadd.f32 %v1851, %v2019
        %v2021 = vpop.f32.mrf.mxu0
        %v2022 = vadd.f32 %v1853, %v2021
        %2023 = vmatmul.bf16.gmra.mxu0 %v1692
        %v2024 = vpop.f32.mrf.mxu0
        %v2025 = vadd.f32 %v1856, %v2024
        %v2026 = vpop.f32.mrf.mxu0
        %v2027 = vadd.f32 %v1858, %v2026
        %2028 = vmatmul.bf16.gmra.mxu0 %v1694
        %v2029 = vpop.f32.mrf.mxu0
        %v2030 = vadd.f32 %v1861, %v2029
        %v2031 = vpop.f32.mrf.mxu0
        %v2032 = vadd.f32 %v1863, %v2031
        %2033 = vmatmul.bf16.gmra.mxu0 %v1696
        %v2034 = vpop.f32.mrf.mxu0
        %v2035 = vadd.f32 %v1866, %v2034
        %v2036 = vpop.f32.mrf.mxu0
        %v2037 = vadd.f32 %v1868, %v2036
        %2038 = vmatmul.bf16.gmra.mxu0 %v1698
        %v2039 = vpop.f32.mrf.mxu0
        %v2040 = vadd.f32 %v1871, %v2039
        %v2041 = vpop.f32.mrf.mxu0
        %v2042 = vadd.f32 %v1873, %v2041
        %2043 = vmatmul.bf16.gmra.mxu0 %v1700
        %v2044 = vpop.f32.mrf.mxu0
        %v2045 = vadd.f32 %v1876, %v2044
        %v2046 = vpop.f32.mrf.mxu0
        %v2047 = vadd.f32 %v1878, %v2046
        %2048 = vmatmul.bf16.gmra.mxu0 %v1702
        %v2049 = vpop.f32.mrf.mxu0
        %v2050 = vadd.f32 %v1881, %v2049
        %v2051 = vpop.f32.mrf.mxu0
        %v2052 = vadd.f32 %v1883, %v2051
        %2053 = vmatmul.bf16.gmra.mxu0 %v1704
        %v2054 = vpop.f32.mrf.mxu0
        %v2055 = vadd.f32 %v1886, %v2054
        %v2056 = vpop.f32.mrf.mxu0
        %v2057 = vadd.f32 %v1888, %v2056
        %2058 = vmatmul.bf16.gmra.mxu0 %v1706
        %v2059 = vpop.f32.mrf.mxu0
        %v2060 = vadd.f32 %v1891, %v2059
        %v2061 = vpop.f32.mrf.mxu0
        %v2062 = vadd.f32 %v1893, %v2061
        %2063 = vmatmul.bf16.gmra.mxu0 %v1708
        %v2064 = vpop.f32.mrf.mxu0
        %v2065 = vadd.f32 %v1896, %v2064
        %v2066 = vpop.f32.mrf.mxu0
        %v2067 = vadd.f32 %v1898, %v2066
        %2068 = vmatmul.bf16.gmra.mxu0 %v1710
        %v2069 = vpop.f32.mrf.mxu0
        %v2070 = vadd.f32 %v1901, %v2069
        %v2071 = vpop.f32.mrf.mxu0
        %v2072 = vadd.f32 %v1903, %v2071
        %2073 = vmatmul.bf16.gmra.mxu0 %v1712
        %v2074 = vpop.f32.mrf.mxu0
        %v2075 = vadd.f32 %v1906, %v2074
        %v2076 = vpop.f32.mrf.mxu0
        %v2077 = vadd.f32 %v1908, %v2076
        %2078 = vmatmul.bf16.gmra.mxu0 %v1714
        %v2079 = vpop.f32.mrf.mxu0
        %v2080 = vadd.f32 %v1911, %v2079
        %v2081 = vpop.f32.mrf.mxu0
        %v2082 = vadd.f32 %v1913, %v2081
        %2083 = vmatmul.bf16.gmra.mxu0 %v1716
        %v2084 = vpop.f32.mrf.mxu0
        %v2085 = vadd.f32 %v1916, %v2084
        %v2086 = vpop.f32.mrf.mxu0
        %v2087 = vadd.f32 %v1918, %v2086
        %2088 = vmatmul.bf16.gmra.mxu0 %v1718
        %v2089 = vpop.f32.mrf.mxu0
        %v2090 = vadd.f32 %v1921, %v2089
        %v2091 = vpop.f32.mrf.mxu0
        %v2092 = vadd.f32 %v1923, %v2091
        %2093 = vmatmul.bf16.gmra.mxu0 %v1720
        %v2094 = vpop.f32.mrf.mxu0
        %v2095 = vadd.f32 %v1926, %v2094
        %v2096 = vpop.f32.mrf.mxu0
        %v2097 = vadd.f32 %v1928, %v2096
        %2098 = vmatmul.bf16.gmra.mxu0 %v1722
        %v2099 = vpop.f32.mrf.mxu0
        %v2100 = vadd.f32 %v1931, %v2099
        %v2101 = vpop.f32.mrf.mxu0
        %v2102 = vadd.f32 %v1933, %v2101
        %2103 = vmatmul.bf16.gmra.mxu0 %v1724
        %v2104 = vpop.f32.mrf.mxu0
        %v2105 = vadd.f32 %v1936, %v2104
        %v2106 = vpop.f32.mrf.mxu0
        %v2107 = vadd.f32 %v1938, %v2106
        %2108 = vmatmul.bf16.gmra.mxu0 %v1726
        %v2109 = vpop.f32.mrf.mxu0
        %v2110 = vadd.f32 %v1941, %v2109
        %v2111 = vpop.f32.mrf.mxu0
        %v2112 = vadd.f32 %v1943, %v2111
        %2113 = vmatmul.bf16.gmra.mxu0 %v1728
        %v2114 = vpop.f32.mrf.mxu0
        %v2115 = vadd.f32 %v1946, %v2114
        %v2116 = vpop.f32.mrf.mxu0
        %v2117 = vadd.f32 %v1948, %v2116
        %2118 = vmatmul.bf16.gmra.mxu0 %v1730
        %v2119 = vpop.f32.mrf.mxu0
        %v2120 = vadd.f32 %v1951, %v2119
        %v2121 = vpop.f32.mrf.mxu0
        %v2122 = vadd.f32 %v1953, %v2121
        %2123 = vmatmul.bf16.gmra.mxu0 %v1732
        %v2124 = vpop.f32.mrf.mxu0
        %v2125 = vadd.f32 %v1956, %v2124
        %v2126 = vpop.f32.mrf.mxu0
        %v2127 = vadd.f32 %v1958, %v2126
        %2128 = vmatmul.bf16.gmra.mxu0 %v1734
        %v2129 = vpop.f32.mrf.mxu0
        %v2130 = vadd.f32 %v1961, %v2129
        %v2131 = vpop.f32.mrf.mxu0
        %v2132 = vadd.f32 %v1963, %v2131
        %2133 = vmatmul.bf16.gmra.mxu0 %v1736
        %v2134 = vpop.f32.mrf.mxu0
        %v2135 = vadd.f32 %v1966, %v2134
        %v2136 = vpop.f32.mrf.mxu0
        %v2137 = vadd.f32 %v1968, %v2136
        %2138 = vdwg.mxu0
        %v2139 = vmax.f32 %v1980, 0.0
        %v2140 = vmax.f32 %v1982, 0.0
        %v2141 = vmax.f32 %v1985, 0.0
        %v2142 = vmax.f32 %v1987, 0.0
        %v2143 = vmax.f32 %v1990, 0.0
        %v2144 = vmax.f32 %v1992, 0.0
        %v2145 = vmax.f32 %v1995, 0.0
        %v2146 = vmax.f32 %v1997, 0.0
        %v2147 = vmax.f32 %v2000, 0.0
        %v2148 = vmax.f32 %v2002, 0.0
        %v2149 = vmax.f32 %v2005, 0.0
        %v2150 = vmax.f32 %v2007, 0.0
        %v2151 = vmax.f32 %v2010, 0.0
        %v2152 = vmax.f32 %v2012, 0.0
        %v2153 = vmax.f32 %v2015, 0.0
        %v2154 = vmax.f32 %v2017, 0.0
        %v2155 = vmax.f32 %v2020, 0.0
        %v2156 = vmax.f32 %v2022, 0.0
        %v2157 = vmax.f32 %v2025, 0.0
        %v2158 = vmax.f32 %v2027, 0.0
        %v2159 = vmax.f32 %v2030, 0.0
        %v2160 = vmax.f32 %v2032, 0.0
        %v2161 = vmax.f32 %v2035, 0.0
        %v2162 = vmax.f32 %v2037, 0.0
        %v2163 = vmax.f32 %v2040, 0.0
        %v2164 = vmax.f32 %v2042, 0.0
        %v2165 = vmax.f32 %v2045, 0.0
        %v2166 = vmax.f32 %v2047, 0.0
        %v2167 = vmax.f32 %v2050, 0.0
        %v2168 = vmax.f32 %v2052, 0.0
        %v2169 = vmax.f32 %v2055, 0.0
        %v2170 = vmax.f32 %v2057, 0.0
        %v2171 = vmax.f32 %v2060, 0.0
        %v2172 = vmax.f32 %v2062, 0.0
        %v2173 = vmax.f32 %v2065, 0.0
        %v2174 = vmax.f32 %v2067, 0.0
        %v2175 = vmax.f32 %v2070, 0.0
        %v2176 = vmax.f32 %v2072, 0.0
        %v2177 = vmax.f32 %v2075, 0.0
        %v2178 = vmax.f32 %v2077, 0.0
        %v2179 = vmax.f32 %v2080, 0.0
        %v2180 = vmax.f32 %v2082, 0.0
        %v2181 = vmax.f32 %v2085, 0.0
        %v2182 = vmax.f32 %v2087, 0.0
        %v2183 = vmax.f32 %v2090, 0.0
        %v2184 = vmax.f32 %v2092, 0.0
        %v2185 = vmax.f32 %v2095, 0.0
        %v2186 = vmax.f32 %v2097, 0.0
        %v2187 = vmax.f32 %v2100, 0.0
        %v2188 = vmax.f32 %v2102, 0.0
        %v2189 = vmax.f32 %v2105, 0.0
        %v2190 = vmax.f32 %v2107, 0.0
        %v2191 = vmax.f32 %v2110, 0.0
        %v2192 = vmax.f32 %v2112, 0.0
        %v2193 = vmax.f32 %v2115, 0.0
        %v2194 = vmax.f32 %v2117, 0.0
        %v2195 = vmax.f32 %v2120, 0.0
        %v2196 = vmax.f32 %v2122, 0.0
        %v2197 = vmax.f32 %v2125, 0.0
        %v2198 = vmax.f32 %v2127, 0.0
        %v2199 = vmax.f32 %v2130, 0.0
        %v2200 = vmax.f32 %v2132, 0.0
        %v2201 = vmax.f32 %v2135, 0.0
        %v2202 = vmax.f32 %v2137, 0.0
        %v2203 = vpack.c.bf16 %v2140, %v2139
        %v2204 = vpack.c.bf16 %v2142, %v2141
        %v2205 = vpack.c.bf16 %v2144, %v2143
        %v2206 = vpack.c.bf16 %v2146, %v2145
        %v2207 = vpack.c.bf16 %v2148, %v2147
        %v2208 = vpack.c.bf16 %v2150, %v2149
        %v2209 = vpack.c.bf16 %v2152, %v2151
        %v2210 = vpack.c.bf16 %v2154, %v2153
        %v2211 = vpack.c.bf16 %v2156, %v2155
        %v2212 = vpack.c.bf16 %v2158, %v2157
        %v2213 = vpack.c.bf16 %v2160, %v2159
        %v2214 = vpack.c.bf16 %v2162, %v2161
        %v2215 = vpack.c.bf16 %v2164, %v2163
        %v2216 = vpack.c.bf16 %v2166, %v2165
        %v2217 = vpack.c.bf16 %v2168, %v2167
        %v2218 = vpack.c.bf16 %v2170, %v2169
        %v2219 = vpack.c.bf16 %v2172, %v2171
        %v2220 = vpack.c.bf16 %v2174, %v2173
        %v2221 = vpack.c.bf16 %v2176, %v2175
        %v2222 = vpack.c.bf16 %v2178, %v2177
        %v2223 = vpack.c.bf16 %v2180, %v2179
        %v2224 = vpack.c.bf16 %v2182, %v2181
        %v2225 = vpack.c.bf16 %v2184, %v2183
        %v2226 = vpack.c.bf16 %v2186, %v2185
        %v2227 = vpack.c.bf16 %v2188, %v2187
        %v2228 = vpack.c.bf16 %v2190, %v2189
        %v2229 = vpack.c.bf16 %v2192, %v2191
        %v2230 = vpack.c.bf16 %v2194, %v2193
        %v2231 = vpack.c.bf16 %v2196, %v2195
        %v2232 = vpack.c.bf16 %v2198, %v2197
        %v2233 = vpack.c.bf16 %v2200, %v2199
        %v2234 = vpack.c.bf16 %v2202, %v2201
        %v2235 = vld [vmem:[%s3] sm:$0xff]
        %v2236 = vld [vmem:[%s3 + $0x8] sm:$0xff]
        %v2237 = vld [vmem:[%s3 + $0x10] sm:$0xff]
        %v2238 = vld [vmem:[%s3 + $0x18] sm:$0xff]
        %v2239 = vld [vmem:[%s3 + $0x20] sm:$0xff]
        %v2240 = vld [vmem:[%s3 + $0x28] sm:$0xff]
        %v2241 = vld [vmem:[%s3 + $0x30] sm:$0xff]
        %v2242 = vld [vmem:[%s3 + $0x38] sm:$0xff]
        %v2243 = vld [vmem:[%s9] sm:$0xff]
        %v2244 = vld [vmem:[%s9 + $0x8] sm:$0xff]
        %v2245 = vld [vmem:[%s9 + $0x10] sm:$0xff]
        %v2246 = vld [vmem:[%s9 + $0x18] sm:$0xff]
        %2248 = vset.pattern.permute.xlu0 0
        %2249 = vperm.xlu0 %2248, %v2243
        %v2250 = vpop.permute.xlu0 %2249
        %2253 = vset.pattern.permute.xlu0 0
        %2254 = vperm.xlu0 %2253, %v2244
        %v2255 = vpop.permute.xlu0 %2254
        %2258 = vset.pattern.permute.xlu0 0
        %2259 = vperm.xlu0 %2258, %v2245
        %v2260 = vpop.permute.xlu0 %2259
        %2263 = vset.pattern.permute.xlu0 0
        %2264 = vperm.xlu0 %2263, %v2246
        %v2265 = vpop.permute.xlu0 %2264
        %v2275 = vunpack.c.l.b16 %v2235
        %v2276 = vunpack.c.h.b16 %v2235
        %v2277 = vunpack.c.l.b16 %v2236
        %v2278 = vunpack.c.h.b16 %v2236
        %v2279 = vunpack.c.l.b16 %v2237
        %v2280 = vunpack.c.h.b16 %v2237
        %v2281 = vunpack.c.l.b16 %v2238
        %v2282 = vunpack.c.h.b16 %v2238
        %v2283 = vunpack.c.l.b16 %v2239
        %v2284 = vunpack.c.h.b16 %v2239
        %v2285 = vunpack.c.l.b16 %v2240
        %v2286 = vunpack.c.h.b16 %v2240
        %v2287 = vunpack.c.l.b16 %v2241
        %v2288 = vunpack.c.h.b16 %v2241
        %v2289 = vunpack.c.l.b16 %v2242
        %v2290 = vunpack.c.h.b16 %v2242
        %v2291 = vpack.c.b16 %v2279, %v2275
        %v2292 = vpack.c.b16 %v2280, %v2276
        %v2293 = vpack.c.b16 %v2281, %v2277
        %v2294 = vpack.c.b16 %v2282, %v2278
        %v2295 = vpack.c.b16 %v2287, %v2283
        %v2296 = vpack.c.b16 %v2288, %v2284
        %v2297 = vpack.c.b16 %v2289, %v2285
        %v2298 = vpack.c.b16 %v2290, %v2286
        %2307 = vmatpush.bf16.msra.mxu0 %v2210
        %2308 = vmatpush.bf16.msra.mxu0 %v2209
        %2309 = vmatpush.bf16.msra.mxu0 %v2208
        %2310 = vmatpush.bf16.msra.mxu0 %v2207
        %2311 = vmatpush.bf16.msra.mxu0 %v2206
        %2312 = vmatpush.bf16.msra.mxu0 %v2205
        %2313 = vmatpush.bf16.msra.mxu0 %v2204
        %2314 = vmatpush.bf16.msra.mxu0 %v2203
        %2315 = vmatmul.bf16.gmra.mxu0 %v2291
        %v2316 = vpop.f32.mrf.mxu0
        %v2317 = vadd.f32 %v2250, %v2316
        %v2318 = vpop.f32.mrf.mxu0
        %v2319 = vadd.f32 %v2255, %v2318
        %2320 = vmatmul.bf16.gmra.mxu0 %v2295
        %v2321 = vpop.f32.mrf.mxu0
        %v2322 = vadd.f32 %v2260, %v2321
        %v2323 = vpop.f32.mrf.mxu0
        %v2324 = vadd.f32 %v2265, %v2323
        %2325 = vdwg.mxu0
        %2326 = vmatpush.bf16.msra.mxu0 %v2218
        %2327 = vmatpush.bf16.msra.mxu0 %v2217
        %2328 = vmatpush.bf16.msra.mxu0 %v2216
        %2329 = vmatpush.bf16.msra.mxu0 %v2215
        %2330 = vmatpush.bf16.msra.mxu0 %v2214
        %2331 = vmatpush.bf16.msra.mxu0 %v2213
        %2332 = vmatpush.bf16.msra.mxu0 %v2212
        %2333 = vmatpush.bf16.msra.mxu0 %v2211
        %2334 = vmatmul.bf16.gmra.mxu0 %v2292
        %v2335 = vpop.f32.mrf.mxu0
        %v2336 = vadd.f32 %v2317, %v2335
        %v2337 = vpop.f32.mrf.mxu0
        %v2338 = vadd.f32 %v2319, %v2337
        %2339 = vmatmul.bf16.gmra.mxu0 %v2296
        %v2340 = vpop.f32.mrf.mxu0
        %v2341 = vadd.f32 %v2322, %v2340
        %v2342 = vpop.f32.mrf.mxu0
        %v2343 = vadd.f32 %v2324, %v2342
        %2344 = vdwg.mxu0
        %2345 = vmatpush.bf16.msra.mxu0 %v2226
        %2346 = vmatpush.bf16.msra.mxu0 %v2225
        %2347 = vmatpush.bf16.msra.mxu0 %v2224
        %2348 = vmatpush.bf16.msra.mxu0 %v2223
        %2349 = vmatpush.bf16.msra.mxu0 %v2222
        %2350 = vmatpush.bf16.msra.mxu0 %v2221
        %2351 = vmatpush.bf16.msra.mxu0 %v2220
        %2352 = vmatpush.bf16.msra.mxu0 %v2219
        %2353 = vmatmul.bf16.gmra.mxu0 %v2293
        %v2354 = vpop.f32.mrf.mxu0
        %v2355 = vadd.f32 %v2336, %v2354
        %v2356 = vpop.f32.mrf.mxu0
        %v2357 = vadd.f32 %v2338, %v2356
        %2358 = vmatmul.bf16.gmra.mxu0 %v2297
        %v2359 = vpop.f32.mrf.mxu0
        %v2360 = vadd.f32 %v2341, %v2359
        %v2361 = vpop.f32.mrf.mxu0
        %v2362 = vadd.f32 %v2343, %v2361
        %2363 = vdwg.mxu0
        %2364 = vmatpush.bf16.msra.mxu0 %v2234
        %2365 = vmatpush.bf16.msra.mxu0 %v2233
        %2366 = vmatpush.bf16.msra.mxu0 %v2232
        %2367 = vmatpush.bf16.msra.mxu0 %v2231
        %2368 = vmatpush.bf16.msra.mxu0 %v2230
        %2369 = vmatpush.bf16.msra.mxu0 %v2229
        %2370 = vmatpush.bf16.msra.mxu0 %v2228
        %2371 = vmatpush.bf16.msra.mxu0 %v2227
        %2372 = vmatmul.bf16.gmra.mxu0 %v2294
        %v2373 = vpop.f32.mrf.mxu0
        %v2374 = vadd.f32 %v2355, %v2373
        %v2375 = vpop.f32.mrf.mxu0
        %v2376 = vadd.f32 %v2357, %v2375
        %2377 = vmatmul.bf16.gmra.mxu0 %v2298
        %v2378 = vpop.f32.mrf.mxu0
        %v2379 = vadd.f32 %v2360, %v2378
        %v2380 = vpop.f32.mrf.mxu0
        %v2381 = vadd.f32 %v2362, %v2380
        %2382 = vdwg.mxu0
        %v2383 = vmax.f32 %v2374, 0.0
        %v2384 = vmax.f32 %v2376, 0.0
        %v2385 = vmax.f32 %v2379, 0.0
        %v2386 = vmax.f32 %v2381, 0.0
        %v2387 = vpack.c.bf16 %v2384, %v2383
        %v2388 = vpack.c.bf16 %v2386, %v2385
        %v2389 = vld [vmem:[%s4] sm:$0xf]
        %v2390 = vld [vmem:[%s4 + $0x4] sm:$0xf]
        %v2391 = vld [vmem:[%s4 + $0x8] sm:$0xf]
        %v2392 = vld [vmem:[%s4 + $0xc] sm:$0xf]
        %v2393 = vld [vmem:[%s10] sm:$0xff]
        %v2394 = vld [vmem:[%s10 + $0x8] sm:$0xff]
        %v2395 = vld [vmem:[%s10 + $0x10] sm:$0xff]
        %v2396 = vld [vmem:[%s10 + $0x18] sm:$0xff]
        %2398 = vset.pattern.permute.xlu0 0
        %2399 = vperm.xlu0 %2398, %v2393
        %v2400 = vpop.permute.xlu0 %2399
        %2403 = vset.pattern.permute.xlu0 0
        %2404 = vperm.xlu0 %2403, %v2394
        %v2405 = vpop.permute.xlu0 %2404
        %2408 = vset.pattern.permute.xlu0 0
        %2409 = vperm.xlu0 %2408, %v2395
        %v2410 = vpop.permute.xlu0 %2409
        %2413 = vset.pattern.permute.xlu0 0
        %2414 = vperm.xlu0 %2413, %v2396
        %v2415 = vpop.permute.xlu0 %2414
        %v2421 = vunpack.c.l.b16 %v2389
        %v2422 = vunpack.c.l.b16 %v2390
        %v2423 = vunpack.c.l.b16 %v2391
        %v2424 = vunpack.c.l.b16 %v2392
        %v2425 = vpack.c.b16 %v2422, %v2421
        %v2426 = vpack.c.b16 %v2424, %v2423
        %vm2427 = vcmask 261120
        %v2429 = vsel %vm2427, %v2425, 0
        %v2432 = vsel %vm2427, %v2426, 0
        %2434 = vmatpush.bf16.msra.mxu0 0
        %2435 = vmatpush.bf16.msra.mxu0 0
        %2436 = vmatpush.bf16.msra.mxu0 0
        %2437 = vmatpush.bf16.msra.mxu0 0
        %2438 = vmatpush.bf16.msra.mxu0 0
        %2439 = vmatpush.bf16.msra.mxu0 0
        %2440 = vmatpush.bf16.msra.mxu0 %v2388
        %2441 = vmatpush.bf16.msra.mxu0 %v2387
        %2442 = vmatmul.bf16.gmra.mxu0 %v2429
        %v2443 = vpop.f32.mrf.mxu0
        %v2444 = vadd.f32 %v2400, %v2443
        %v2445 = vpop.f32.mrf.mxu0
        %v2446 = vadd.f32 %v2405, %v2445
        %2447 = vmatmul.bf16.gmra.mxu0 %v2432
        %v2448 = vpop.f32.mrf.mxu0
        %v2449 = vadd.f32 %v2410, %v2448
        %v2450 = vpop.f32.mrf.mxu0
        %v2451 = vadd.f32 %v2415, %v2450
        %2452 = vdwg.mxu0
        %v2453 = vmax.f32 %v2444, 0.0
        %v2454 = vmax.f32 %v2446, 0.0
        %v2455 = vmax.f32 %v2449, 0.0
        %v2456 = vmax.f32 %v2451, 0.0
        %v2457 = vpack.c.bf16 %v2454, %v2453
        %v2458 = vpack.c.bf16 %v2456, %v2455
        %v2459 = vld [vmem:[%s5] sm:$0xf]
        %v2460 = vld [vmem:[%s5 + $0x4] sm:$0xf]
        %v2461 = vld [vmem:[%s5 + $0x8] sm:$0xf]
        %v2462 = vld [vmem:[%s5 + $0xc] sm:$0xf]
        %v2463 = vld [vmem:[%s5 + $0x10] sm:$0xf]
        %v2464 = vld [vmem:[%s5 + $0x14] sm:$0xf]
        %v2465 = vld [vmem:[%s5 + $0x18] sm:$0xf]
        %v2466 = vld [vmem:[%s5 + $0x1c] sm:$0xf]
        %v2467 = vld [vmem:[%s5 + $0x20] sm:$0xf]
        %v2468 = vld [vmem:[%s5 + $0x24] sm:$0xf]
        %v2469 = vld [vmem:[%s5 + $0x28] sm:$0xf]
        %v2470 = vld [vmem:[%s5 + $0x2c] sm:$0xf]
        %v2471 = vld [vmem:[%s5 + $0x30] sm:$0xf]
        %v2472 = vld [vmem:[%s5 + $0x34] sm:$0xf]
        %v2473 = vld [vmem:[%s5 + $0x38] sm:$0xf]
        %v2474 = vld [vmem:[%s5 + $0x3c] sm:$0xf]
        %v2475 = vld [vmem:[%s5 + $0x40] sm:$0xf]
        %v2476 = vld [vmem:[%s5 + $0x44] sm:$0xf]
        %v2477 = vld [vmem:[%s5 + $0x48] sm:$0xf]
        %v2478 = vld [vmem:[%s5 + $0x4c] sm:$0xf]
        %v2479 = vld [vmem:[%s5 + $0x50] sm:$0xf]
        %v2480 = vld [vmem:[%s5 + $0x54] sm:$0xf]
        %v2481 = vld [vmem:[%s5 + $0x58] sm:$0xf]
        %v2482 = vld [vmem:[%s5 + $0x5c] sm:$0xf]
        %v2483 = vld [vmem:[%s5 + $0x60] sm:$0xf]
        %v2484 = vld [vmem:[%s5 + $0x64] sm:$0xf]
        %v2485 = vld [vmem:[%s5 + $0x68] sm:$0xf]
        %v2486 = vld [vmem:[%s5 + $0x6c] sm:$0xf]
        %v2487 = vld [vmem:[%s5 + $0x70] sm:$0xf]
        %v2488 = vld [vmem:[%s5 + $0x74] sm:$0xf]
        %v2489 = vld [vmem:[%s5 + $0x78] sm:$0xf]
        %v2490 = vld [vmem:[%s5 + $0x7c] sm:$0xf]
        %v2491 = vld [vmem:[%s5 + $0x80] sm:$0xf]
        %v2492 = vld [vmem:[%s5 + $0x84] sm:$0xf]
        %v2493 = vld [vmem:[%s5 + $0x88] sm:$0xf]
        %v2494 = vld [vmem:[%s5 + $0x8c] sm:$0xf]
        %v2495 = vld [vmem:[%s5 + $0x90] sm:$0xf]
        %v2496 = vld [vmem:[%s5 + $0x94] sm:$0xf]
        %v2497 = vld [vmem:[%s5 + $0x98] sm:$0xf]
        %v2498 = vld [vmem:[%s5 + $0x9c] sm:$0xf]
        %v2499 = vld [vmem:[%s5 + $0xa0] sm:$0xf]
        %v2500 = vld [vmem:[%s5 + $0xa4] sm:$0xf]
        %v2501 = vld [vmem:[%s5 + $0xa8] sm:$0xf]
        %v2502 = vld [vmem:[%s5 + $0xac] sm:$0xf]
        %v2503 = vld [vmem:[%s5 + $0xb0] sm:$0xf]
        %v2504 = vld [vmem:[%s5 + $0xb4] sm:$0xf]
        %v2505 = vld [vmem:[%s5 + $0xb8] sm:$0xf]
        %v2506 = vld [vmem:[%s5 + $0xbc] sm:$0xf]
        %v2507 = vld [vmem:[%s5 + $0xc0] sm:$0xf]
        %v2508 = vld [vmem:[%s5 + $0xc4] sm:$0xf]
        %v2509 = vld [vmem:[%s5 + $0xc8] sm:$0xf]
        %v2510 = vld [vmem:[%s5 + $0xcc] sm:$0xf]
        %v2511 = vld [vmem:[%s5 + $0xd0] sm:$0xf]
        %v2512 = vld [vmem:[%s5 + $0xd4] sm:$0xf]
        %v2513 = vld [vmem:[%s5 + $0xd8] sm:$0xf]
        %v2514 = vld [vmem:[%s5 + $0xdc] sm:$0xf]
        %v2515 = vld [vmem:[%s5 + $0xe0] sm:$0xf]
        %v2516 = vld [vmem:[%s5 + $0xe4] sm:$0xf]
        %v2517 = vld [vmem:[%s5 + $0xe8] sm:$0xf]
        %v2518 = vld [vmem:[%s5 + $0xec] sm:$0xf]
        %v2519 = vld [vmem:[%s5 + $0xf0] sm:$0xf]
        %v2520 = vld [vmem:[%s5 + $0xf4] sm:$0xf]
        %v2521 = vld [vmem:[%s5 + $0xf8] sm:$0xf]
        %v2522 = vld [vmem:[%s5 + $0xfc] sm:$0xf]
        %v2523 = vld [vmem:[%s11] sm:$0xff]
        %v2524 = vld [vmem:[%s11 + $0x8] sm:$0xff]
        %v2525 = vld [vmem:[%s11 + $0x10] sm:$0xff]
        %v2526 = vld [vmem:[%s11 + $0x18] sm:$0xff]
        %v2527 = vld [vmem:[%s11 + $0x20] sm:$0xff]
        %v2528 = vld [vmem:[%s11 + $0x28] sm:$0xff]
        %v2529 = vld [vmem:[%s11 + $0x30] sm:$0xff]
        %v2530 = vld [vmem:[%s11 + $0x38] sm:$0xff]
        %v2531 = vld [vmem:[%s11 + $0x40] sm:$0xff]
        %v2532 = vld [vmem:[%s11 + $0x48] sm:$0xff]
        %v2533 = vld [vmem:[%s11 + $0x50] sm:$0xff]
        %v2534 = vld [vmem:[%s11 + $0x58] sm:$0xff]
        %v2535 = vld [vmem:[%s11 + $0x60] sm:$0xff]
        %v2536 = vld [vmem:[%s11 + $0x68] sm:$0xff]
        %v2537 = vld [vmem:[%s11 + $0x70] sm:$0xff]
        %v2538 = vld [vmem:[%s11 + $0x78] sm:$0xff]
        %v2539 = vld [vmem:[%s11 + $0x80] sm:$0xff]
        %v2540 = vld [vmem:[%s11 + $0x88] sm:$0xff]
        %v2541 = vld [vmem:[%s11 + $0x90] sm:$0xff]
        %v2542 = vld [vmem:[%s11 + $0x98] sm:$0xff]
        %v2543 = vld [vmem:[%s11 + $0xa0] sm:$0xff]
        %v2544 = vld [vmem:[%s11 + $0xa8] sm:$0xff]
        %v2545 = vld [vmem:[%s11 + $0xb0] sm:$0xff]
        %v2546 = vld [vmem:[%s11 + $0xb8] sm:$0xff]
        %v2547 = vld [vmem:[%s11 + $0xc0] sm:$0xff]
        %v2548 = vld [vmem:[%s11 + $0xc8] sm:$0xff]
        %v2549 = vld [vmem:[%s11 + $0xd0] sm:$0xff]
        %v2550 = vld [vmem:[%s11 + $0xd8] sm:$0xff]
        %v2551 = vld [vmem:[%s11 + $0xe0] sm:$0xff]
        %v2552 = vld [vmem:[%s11 + $0xe8] sm:$0xff]
        %v2553 = vld [vmem:[%s11 + $0xf0] sm:$0xff]
        %v2554 = vld [vmem:[%s11 + $0xf8] sm:$0xff]
        %v2555 = vld [vmem:[%s11 + $0x100] sm:$0xff]
        %v2556 = vld [vmem:[%s11 + $0x108] sm:$0xff]
        %v2557 = vld [vmem:[%s11 + $0x110] sm:$0xff]
        %v2558 = vld [vmem:[%s11 + $0x118] sm:$0xff]
        %v2559 = vld [vmem:[%s11 + $0x120] sm:$0xff]
        %v2560 = vld [vmem:[%s11 + $0x128] sm:$0xff]
        %v2561 = vld [vmem:[%s11 + $0x130] sm:$0xff]
        %v2562 = vld [vmem:[%s11 + $0x138] sm:$0xff]
        %v2563 = vld [vmem:[%s11 + $0x140] sm:$0xff]
        %v2564 = vld [vmem:[%s11 + $0x148] sm:$0xff]
        %v2565 = vld [vmem:[%s11 + $0x150] sm:$0xff]
        %v2566 = vld [vmem:[%s11 + $0x158] sm:$0xff]
        %v2567 = vld [vmem:[%s11 + $0x160] sm:$0xff]
        %v2568 = vld [vmem:[%s11 + $0x168] sm:$0xff]
        %v2569 = vld [vmem:[%s11 + $0x170] sm:$0xff]
        %v2570 = vld [vmem:[%s11 + $0x178] sm:$0xff]
        %v2571 = vld [vmem:[%s11 + $0x180] sm:$0xff]
        %v2572 = vld [vmem:[%s11 + $0x188] sm:$0xff]
        %v2573 = vld [vmem:[%s11 + $0x190] sm:$0xff]
        %v2574 = vld [vmem:[%s11 + $0x198] sm:$0xff]
        %v2575 = vld [vmem:[%s11 + $0x1a0] sm:$0xff]
        %v2576 = vld [vmem:[%s11 + $0x1a8] sm:$0xff]
        %v2577 = vld [vmem:[%s11 + $0x1b0] sm:$0xff]
        %v2578 = vld [vmem:[%s11 + $0x1b8] sm:$0xff]
        %v2579 = vld [vmem:[%s11 + $0x1c0] sm:$0xff]
        %v2580 = vld [vmem:[%s11 + $0x1c8] sm:$0xff]
        %v2581 = vld [vmem:[%s11 + $0x1d0] sm:$0xff]
        %v2582 = vld [vmem:[%s11 + $0x1d8] sm:$0xff]
        %v2583 = vld [vmem:[%s11 + $0x1e0] sm:$0xff]
        %v2584 = vld [vmem:[%s11 + $0x1e8] sm:$0xff]
        %v2585 = vld [vmem:[%s11 + $0x1f0] sm:$0xff]
        %v2586 = vld [vmem:[%s11 + $0x1f8] sm:$0xff]
        %2588 = vset.pattern.permute.xlu0 0
        %2589 = vperm.xlu0 %2588, %v2523
        %v2590 = vpop.permute.xlu0 %2589
        %2593 = vset.pattern.permute.xlu0 0
        %2594 = vperm.xlu0 %2593, %v2524
        %v2595 = vpop.permute.xlu0 %2594
        %2598 = vset.pattern.permute.xlu0 0
        %2599 = vperm.xlu0 %2598, %v2525
        %v2600 = vpop.permute.xlu0 %2599
        %2603 = vset.pattern.permute.xlu0 0
        %2604 = vperm.xlu0 %2603, %v2526
        %v2605 = vpop.permute.xlu0 %2604
        %2608 = vset.pattern.permute.xlu0 0
        %2609 = vperm.xlu0 %2608, %v2527
        %v2610 = vpop.permute.xlu0 %2609
        %2613 = vset.pattern.permute.xlu0 0
        %2614 = vperm.xlu0 %2613, %v2528
        %v2615 = vpop.permute.xlu0 %2614
        %2618 = vset.pattern.permute.xlu0 0
        %2619 = vperm.xlu0 %2618, %v2529
        %v2620 = vpop.permute.xlu0 %2619
        %2623 = vset.pattern.permute.xlu0 0
        %2624 = vperm.xlu0 %2623, %v2530
        %v2625 = vpop.permute.xlu0 %2624
        %2628 = vset.pattern.permute.xlu0 0
        %2629 = vperm.xlu0 %2628, %v2531
        %v2630 = vpop.permute.xlu0 %2629
        %2633 = vset.pattern.permute.xlu0 0
        %2634 = vperm.xlu0 %2633, %v2532
        %v2635 = vpop.permute.xlu0 %2634
        %2638 = vset.pattern.permute.xlu0 0
        %2639 = vperm.xlu0 %2638, %v2533
        %v2640 = vpop.permute.xlu0 %2639
        %2643 = vset.pattern.permute.xlu0 0
        %2644 = vperm.xlu0 %2643, %v2534
        %v2645 = vpop.permute.xlu0 %2644
        %2648 = vset.pattern.permute.xlu0 0
        %2649 = vperm.xlu0 %2648, %v2535
        %v2650 = vpop.permute.xlu0 %2649
        %2653 = vset.pattern.permute.xlu0 0
        %2654 = vperm.xlu0 %2653, %v2536
        %v2655 = vpop.permute.xlu0 %2654
        %2658 = vset.pattern.permute.xlu0 0
        %2659 = vperm.xlu0 %2658, %v2537
        %v2660 = vpop.permute.xlu0 %2659
        %2663 = vset.pattern.permute.xlu0 0
        %2664 = vperm.xlu0 %2663, %v2538
        %v2665 = vpop.permute.xlu0 %2664
        %2668 = vset.pattern.permute.xlu0 0
        %2669 = vperm.xlu0 %2668, %v2539
        %v2670 = vpop.permute.xlu0 %2669
        %2673 = vset.pattern.permute.xlu0 0
        %2674 = vperm.xlu0 %2673, %v2540
        %v2675 = vpop.permute.xlu0 %2674
        %2678 = vset.pattern.permute.xlu0 0
        %2679 = vperm.xlu0 %2678, %v2541
        %v2680 = vpop.permute.xlu0 %2679
        %2683 = vset.pattern.permute.xlu0 0
        %2684 = vperm.xlu0 %2683, %v2542
        %v2685 = vpop.permute.xlu0 %2684
        %2688 = vset.pattern.permute.xlu0 0
        %2689 = vperm.xlu0 %2688, %v2543
        %v2690 = vpop.permute.xlu0 %2689
        %2693 = vset.pattern.permute.xlu0 0
        %2694 = vperm.xlu0 %2693, %v2544
        %v2695 = vpop.permute.xlu0 %2694
        %2698 = vset.pattern.permute.xlu0 0
        %2699 = vperm.xlu0 %2698, %v2545
        %v2700 = vpop.permute.xlu0 %2699
        %2703 = vset.pattern.permute.xlu0 0
        %2704 = vperm.xlu0 %2703, %v2546
        %v2705 = vpop.permute.xlu0 %2704
        %2708 = vset.pattern.permute.xlu0 0
        %2709 = vperm.xlu0 %2708, %v2547
        %v2710 = vpop.permute.xlu0 %2709
        %2713 = vset.pattern.permute.xlu0 0
        %2714 = vperm.xlu0 %2713, %v2548
        %v2715 = vpop.permute.xlu0 %2714
        %2718 = vset.pattern.permute.xlu0 0
        %2719 = vperm.xlu0 %2718, %v2549
        %v2720 = vpop.permute.xlu0 %2719
        %2723 = vset.pattern.permute.xlu0 0
        %2724 = vperm.xlu0 %2723, %v2550
        %v2725 = vpop.permute.xlu0 %2724
        %2728 = vset.pattern.permute.xlu0 0
        %2729 = vperm.xlu0 %2728, %v2551
        %v2730 = vpop.permute.xlu0 %2729
        %2733 = vset.pattern.permute.xlu0 0
        %2734 = vperm.xlu0 %2733, %v2552
        %v2735 = vpop.permute.xlu0 %2734
        %2738 = vset.pattern.permute.xlu0 0
        %2739 = vperm.xlu0 %2738, %v2553
        %v2740 = vpop.permute.xlu0 %2739
        %2743 = vset.pattern.permute.xlu0 0
        %2744 = vperm.xlu0 %2743, %v2554
        %v2745 = vpop.permute.xlu0 %2744
        %2748 = vset.pattern.permute.xlu0 0
        %2749 = vperm.xlu0 %2748, %v2555
        %v2750 = vpop.permute.xlu0 %2749
        %2753 = vset.pattern.permute.xlu0 0
        %2754 = vperm.xlu0 %2753, %v2556
        %v2755 = vpop.permute.xlu0 %2754
        %2758 = vset.pattern.permute.xlu0 0
        %2759 = vperm.xlu0 %2758, %v2557
        %v2760 = vpop.permute.xlu0 %2759
        %2763 = vset.pattern.permute.xlu0 0
        %2764 = vperm.xlu0 %2763, %v2558
        %v2765 = vpop.permute.xlu0 %2764
        %2768 = vset.pattern.permute.xlu0 0
        %2769 = vperm.xlu0 %2768, %v2559
        %v2770 = vpop.permute.xlu0 %2769
        %2773 = vset.pattern.permute.xlu0 0
        %2774 = vperm.xlu0 %2773, %v2560
        %v2775 = vpop.permute.xlu0 %2774
        %2778 = vset.pattern.permute.xlu0 0
        %2779 = vperm.xlu0 %2778, %v2561
        %v2780 = vpop.permute.xlu0 %2779
        %2783 = vset.pattern.permute.xlu0 0
        %2784 = vperm.xlu0 %2783, %v2562
        %v2785 = vpop.permute.xlu0 %2784
        %2788 = vset.pattern.permute.xlu0 0
        %2789 = vperm.xlu0 %2788, %v2563
        %v2790 = vpop.permute.xlu0 %2789
        %2793 = vset.pattern.permute.xlu0 0
        %2794 = vperm.xlu0 %2793, %v2564
        %v2795 = vpop.permute.xlu0 %2794
        %2798 = vset.pattern.permute.xlu0 0
        %2799 = vperm.xlu0 %2798, %v2565
        %v2800 = vpop.permute.xlu0 %2799
        %2803 = vset.pattern.permute.xlu0 0
        %2804 = vperm.xlu0 %2803, %v2566
        %v2805 = vpop.permute.xlu0 %2804
        %2808 = vset.pattern.permute.xlu0 0
        %2809 = vperm.xlu0 %2808, %v2567
        %v2810 = vpop.permute.xlu0 %2809
        %2813 = vset.pattern.permute.xlu0 0
        %2814 = vperm.xlu0 %2813, %v2568
        %v2815 = vpop.permute.xlu0 %2814
        %2818 = vset.pattern.permute.xlu0 0
        %2819 = vperm.xlu0 %2818, %v2569
        %v2820 = vpop.permute.xlu0 %2819
        %2823 = vset.pattern.permute.xlu0 0
        %2824 = vperm.xlu0 %2823, %v2570
        %v2825 = vpop.permute.xlu0 %2824
        %2828 = vset.pattern.permute.xlu0 0
        %2829 = vperm.xlu0 %2828, %v2571
        %v2830 = vpop.permute.xlu0 %2829
        %2833 = vset.pattern.permute.xlu0 0
        %2834 = vperm.xlu0 %2833, %v2572
        %v2835 = vpop.permute.xlu0 %2834
        %2838 = vset.pattern.permute.xlu0 0
        %2839 = vperm.xlu0 %2838, %v2573
        %v2840 = vpop.permute.xlu0 %2839
        %2843 = vset.pattern.permute.xlu0 0
        %2844 = vperm.xlu0 %2843, %v2574
        %v2845 = vpop.permute.xlu0 %2844
        %2848 = vset.pattern.permute.xlu0 0
        %2849 = vperm.xlu0 %2848, %v2575
        %v2850 = vpop.permute.xlu0 %2849
        %2853 = vset.pattern.permute.xlu0 0
        %2854 = vperm.xlu0 %2853, %v2576
        %v2855 = vpop.permute.xlu0 %2854
        %2858 = vset.pattern.permute.xlu0 0
        %2859 = vperm.xlu0 %2858, %v2577
        %v2860 = vpop.permute.xlu0 %2859
        %2863 = vset.pattern.permute.xlu0 0
        %2864 = vperm.xlu0 %2863, %v2578
        %v2865 = vpop.permute.xlu0 %2864
        %2868 = vset.pattern.permute.xlu0 0
        %2869 = vperm.xlu0 %2868, %v2579
        %v2870 = vpop.permute.xlu0 %2869
        %2873 = vset.pattern.permute.xlu0 0
        %2874 = vperm.xlu0 %2873, %v2580
        %v2875 = vpop.permute.xlu0 %2874
        %2878 = vset.pattern.permute.xlu0 0
        %2879 = vperm.xlu0 %2878, %v2581
        %v2880 = vpop.permute.xlu0 %2879
        %2883 = vset.pattern.permute.xlu0 0
        %2884 = vperm.xlu0 %2883, %v2582
        %v2885 = vpop.permute.xlu0 %2884
        %2888 = vset.pattern.permute.xlu0 0
        %2889 = vperm.xlu0 %2888, %v2583
        %v2890 = vpop.permute.xlu0 %2889
        %2893 = vset.pattern.permute.xlu0 0
        %2894 = vperm.xlu0 %2893, %v2584
        %v2895 = vpop.permute.xlu0 %2894
        %2898 = vset.pattern.permute.xlu0 0
        %2899 = vperm.xlu0 %2898, %v2585
        %v2900 = vpop.permute.xlu0 %2899
        %2903 = vset.pattern.permute.xlu0 0
        %2904 = vperm.xlu0 %2903, %v2586
        %v2905 = vpop.permute.xlu0 %2904
        %v2971 = vunpack.c.l.b16 %v2459
        %v2972 = vunpack.c.l.b16 %v2460
        %v2973 = vunpack.c.l.b16 %v2461
        %v2974 = vunpack.c.l.b16 %v2462
        %v2975 = vunpack.c.l.b16 %v2463
        %v2976 = vunpack.c.l.b16 %v2464
        %v2977 = vunpack.c.l.b16 %v2465
        %v2978 = vunpack.c.l.b16 %v2466
        %v2979 = vunpack.c.l.b16 %v2467
        %v2980 = vunpack.c.l.b16 %v2468
        %v2981 = vunpack.c.l.b16 %v2469
        %v2982 = vunpack.c.l.b16 %v2470
        %v2983 = vunpack.c.l.b16 %v2471
        %v2984 = vunpack.c.l.b16 %v2472
        %v2985 = vunpack.c.l.b16 %v2473
        %v2986 = vunpack.c.l.b16 %v2474
        %v2987 = vunpack.c.l.b16 %v2475
        %v2988 = vunpack.c.l.b16 %v2476
        %v2989 = vunpack.c.l.b16 %v2477
        %v2990 = vunpack.c.l.b16 %v2478
        %v2991 = vunpack.c.l.b16 %v2479
        %v2992 = vunpack.c.l.b16 %v2480
        %v2993 = vunpack.c.l.b16 %v2481
        %v2994 = vunpack.c.l.b16 %v2482
        %v2995 = vunpack.c.l.b16 %v2483
        %v2996 = vunpack.c.l.b16 %v2484
        %v2997 = vunpack.c.l.b16 %v2485
        %v2998 = vunpack.c.l.b16 %v2486
        %v2999 = vunpack.c.l.b16 %v2487
        %v3000 = vunpack.c.l.b16 %v2488
        %v3001 = vunpack.c.l.b16 %v2489
        %v3002 = vunpack.c.l.b16 %v2490
        %v3003 = vunpack.c.l.b16 %v2491
        %v3004 = vunpack.c.l.b16 %v2492
        %v3005 = vunpack.c.l.b16 %v2493
        %v3006 = vunpack.c.l.b16 %v2494
        %v3007 = vunpack.c.l.b16 %v2495
        %v3008 = vunpack.c.l.b16 %v2496
        %v3009 = vunpack.c.l.b16 %v2497
        %v3010 = vunpack.c.l.b16 %v2498
        %v3011 = vunpack.c.l.b16 %v2499
        %v3012 = vunpack.c.l.b16 %v2500
        %v3013 = vunpack.c.l.b16 %v2501
        %v3014 = vunpack.c.l.b16 %v2502
        %v3015 = vunpack.c.l.b16 %v2503
        %v3016 = vunpack.c.l.b16 %v2504
        %v3017 = vunpack.c.l.b16 %v2505
        %v3018 = vunpack.c.l.b16 %v2506
        %v3019 = vunpack.c.l.b16 %v2507
        %v3020 = vunpack.c.l.b16 %v2508
        %v3021 = vunpack.c.l.b16 %v2509
        %v3022 = vunpack.c.l.b16 %v2510
        %v3023 = vunpack.c.l.b16 %v2511
        %v3024 = vunpack.c.l.b16 %v2512
        %v3025 = vunpack.c.l.b16 %v2513
        %v3026 = vunpack.c.l.b16 %v2514
        %v3027 = vunpack.c.l.b16 %v2515
        %v3028 = vunpack.c.l.b16 %v2516
        %v3029 = vunpack.c.l.b16 %v2517
        %v3030 = vunpack.c.l.b16 %v2518
        %v3031 = vunpack.c.l.b16 %v2519
        %v3032 = vunpack.c.l.b16 %v2520
        %v3033 = vunpack.c.l.b16 %v2521
        %v3034 = vunpack.c.l.b16 %v2522
        %v3035 = vpack.c.b16 %v2972, %v2971
        %v3036 = vpack.c.b16 %v2974, %v2973
        %v3037 = vpack.c.b16 %v2976, %v2975
        %v3038 = vpack.c.b16 %v2978, %v2977
        %v3039 = vpack.c.b16 %v2980, %v2979
        %v3040 = vpack.c.b16 %v2982, %v2981
        %v3041 = vpack.c.b16 %v2984, %v2983
        %v3042 = vpack.c.b16 %v2986, %v2985
        %v3043 = vpack.c.b16 %v2988, %v2987
        %v3044 = vpack.c.b16 %v2990, %v2989
        %v3045 = vpack.c.b16 %v2992, %v2991
        %v3046 = vpack.c.b16 %v2994, %v2993
        %v3047 = vpack.c.b16 %v2996, %v2995
        %v3048 = vpack.c.b16 %v2998, %v2997
        %v3049 = vpack.c.b16 %v3000, %v2999
        %v3050 = vpack.c.b16 %v3002, %v3001
        %v3051 = vpack.c.b16 %v3004, %v3003
        %v3052 = vpack.c.b16 %v3006, %v3005
        %v3053 = vpack.c.b16 %v3008, %v3007
        %v3054 = vpack.c.b16 %v3010, %v3009
        %v3055 = vpack.c.b16 %v3012, %v3011
        %v3056 = vpack.c.b16 %v3014, %v3013
        %v3057 = vpack.c.b16 %v3016, %v3015
        %v3058 = vpack.c.b16 %v3018, %v3017
        %v3059 = vpack.c.b16 %v3020, %v3019
        %v3060 = vpack.c.b16 %v3022, %v3021
        %v3061 = vpack.c.b16 %v3024, %v3023
        %v3062 = vpack.c.b16 %v3026, %v3025
        %v3063 = vpack.c.b16 %v3028, %v3027
        %v3064 = vpack.c.b16 %v3030, %v3029
        %v3065 = vpack.c.b16 %v3032, %v3031
        %v3066 = vpack.c.b16 %v3034, %v3033
        %v3068 = vsel %vm2427, %v3035, 0
        %v3071 = vsel %vm2427, %v3036, 0
        %v3074 = vsel %vm2427, %v3037, 0
        %v3077 = vsel %vm2427, %v3038, 0
        %v3080 = vsel %vm2427, %v3039, 0
        %v3083 = vsel %vm2427, %v3040, 0
        %v3086 = vsel %vm2427, %v3041, 0
        %v3089 = vsel %vm2427, %v3042, 0
        %v3092 = vsel %vm2427, %v3043, 0
        %v3095 = vsel %vm2427, %v3044, 0
        %v3098 = vsel %vm2427, %v3045, 0
        %v3101 = vsel %vm2427, %v3046, 0
        %v3104 = vsel %vm2427, %v3047, 0
        %v3107 = vsel %vm2427, %v3048, 0
        %v3110 = vsel %vm2427, %v3049, 0
        %v3113 = vsel %vm2427, %v3050, 0
        %v3116 = vsel %vm2427, %v3051, 0
        %v3119 = vsel %vm2427, %v3052, 0
        %v3122 = vsel %vm2427, %v3053, 0
        %v3125 = vsel %vm2427, %v3054, 0
        %v3128 = vsel %vm2427, %v3055, 0
        %v3131 = vsel %vm2427, %v3056, 0
        %v3134 = vsel %vm2427, %v3057, 0
        %v3137 = vsel %vm2427, %v3058, 0
        %v3140 = vsel %vm2427, %v3059, 0
        %v3143 = vsel %vm2427, %v3060, 0
        %v3146 = vsel %vm2427, %v3061, 0
        %v3149 = vsel %vm2427, %v3062, 0
        %v3152 = vsel %vm2427, %v3063, 0
        %v3155 = vsel %vm2427, %v3064, 0
        %v3158 = vsel %vm2427, %v3065, 0
        %v3161 = vsel %vm2427, %v3066, 0
        %3163 = vmatpush.bf16.msra.mxu0 0
        %3164 = vmatpush.bf16.msra.mxu0 0
        %3165 = vmatpush.bf16.msra.mxu0 0
        %3166 = vmatpush.bf16.msra.mxu0 0
        %3167 = vmatpush.bf16.msra.mxu0 0
        %3168 = vmatpush.bf16.msra.mxu0 0
        %3169 = vmatpush.bf16.msra.mxu0 %v2458
        %3170 = vmatpush.bf16.msra.mxu0 %v2457
        %3171 = vmatmul.bf16.gmra.mxu0 %v3068
        %v3172 = vpop.f32.mrf.mxu0
        %v3173 = vadd.f32 %v2590, %v3172
        %v3174 = vpop.f32.mrf.mxu0
        %v3175 = vadd.f32 %v2595, %v3174
        %3176 = vmatmul.bf16.gmra.mxu0 %v3071
        %v3177 = vpop.f32.mrf.mxu0
        %v3178 = vadd.f32 %v2600, %v3177
        %v3179 = vpop.f32.mrf.mxu0
        %v3180 = vadd.f32 %v2605, %v3179
        %3181 = vmatmul.bf16.gmra.mxu0 %v3074
        %v3182 = vpop.f32.mrf.mxu0
        %v3183 = vadd.f32 %v2610, %v3182
        %v3184 = vpop.f32.mrf.mxu0
        %v3185 = vadd.f32 %v2615, %v3184
        %3186 = vmatmul.bf16.gmra.mxu0 %v3077
        %v3187 = vpop.f32.mrf.mxu0
        %v3188 = vadd.f32 %v2620, %v3187
        %v3189 = vpop.f32.mrf.mxu0
        %v3190 = vadd.f32 %v2625, %v3189
        %3191 = vmatmul.bf16.gmra.mxu0 %v3080
        %v3192 = vpop.f32.mrf.mxu0
        %v3193 = vadd.f32 %v2630, %v3192
        %v3194 = vpop.f32.mrf.mxu0
        %v3195 = vadd.f32 %v2635, %v3194
        %3196 = vmatmul.bf16.gmra.mxu0 %v3083
        %v3197 = vpop.f32.mrf.mxu0
        %v3198 = vadd.f32 %v2640, %v3197
        %v3199 = vpop.f32.mrf.mxu0
        %v3200 = vadd.f32 %v2645, %v3199
        %3201 = vmatmul.bf16.gmra.mxu0 %v3086
        %v3202 = vpop.f32.mrf.mxu0
        %v3203 = vadd.f32 %v2650, %v3202
        %v3204 = vpop.f32.mrf.mxu0
        %v3205 = vadd.f32 %v2655, %v3204
        %3206 = vmatmul.bf16.gmra.mxu0 %v3089
        %v3207 = vpop.f32.mrf.mxu0
        %v3208 = vadd.f32 %v2660, %v3207
        %v3209 = vpop.f32.mrf.mxu0
        %v3210 = vadd.f32 %v2665, %v3209
        %3211 = vmatmul.bf16.gmra.mxu0 %v3092
        %v3212 = vpop.f32.mrf.mxu0
        %v3213 = vadd.f32 %v2670, %v3212
        %v3214 = vpop.f32.mrf.mxu0
        %v3215 = vadd.f32 %v2675, %v3214
        %3216 = vmatmul.bf16.gmra.mxu0 %v3095
        %v3217 = vpop.f32.mrf.mxu0
        %v3218 = vadd.f32 %v2680, %v3217
        %v3219 = vpop.f32.mrf.mxu0
        %v3220 = vadd.f32 %v2685, %v3219
        %3221 = vmatmul.bf16.gmra.mxu0 %v3098
        %v3222 = vpop.f32.mrf.mxu0
        %v3223 = vadd.f32 %v2690, %v3222
        %v3224 = vpop.f32.mrf.mxu0
        %v3225 = vadd.f32 %v2695, %v3224
        %3226 = vmatmul.bf16.gmra.mxu0 %v3101
        %v3227 = vpop.f32.mrf.mxu0
        %v3228 = vadd.f32 %v2700, %v3227
        %v3229 = vpop.f32.mrf.mxu0
        %v3230 = vadd.f32 %v2705, %v3229
        %3231 = vmatmul.bf16.gmra.mxu0 %v3104
        %v3232 = vpop.f32.mrf.mxu0
        %v3233 = vadd.f32 %v2710, %v3232
        %v3234 = vpop.f32.mrf.mxu0
        %v3235 = vadd.f32 %v2715, %v3234
        %3236 = vmatmul.bf16.gmra.mxu0 %v3107
        %v3237 = vpop.f32.mrf.mxu0
        %v3238 = vadd.f32 %v2720, %v3237
        %v3239 = vpop.f32.mrf.mxu0
        %v3240 = vadd.f32 %v2725, %v3239
        %3241 = vmatmul.bf16.gmra.mxu0 %v3110
        %v3242 = vpop.f32.mrf.mxu0
        %v3243 = vadd.f32 %v2730, %v3242
        %v3244 = vpop.f32.mrf.mxu0
        %v3245 = vadd.f32 %v2735, %v3244
        %3246 = vmatmul.bf16.gmra.mxu0 %v3113
        %v3247 = vpop.f32.mrf.mxu0
        %v3248 = vadd.f32 %v2740, %v3247
        %v3249 = vpop.f32.mrf.mxu0
        %v3250 = vadd.f32 %v2745, %v3249
        %3251 = vmatmul.bf16.gmra.mxu0 %v3116
        %v3252 = vpop.f32.mrf.mxu0
        %v3253 = vadd.f32 %v2750, %v3252
        %v3254 = vpop.f32.mrf.mxu0
        %v3255 = vadd.f32 %v2755, %v3254
        %3256 = vmatmul.bf16.gmra.mxu0 %v3119
        %v3257 = vpop.f32.mrf.mxu0
        %v3258 = vadd.f32 %v2760, %v3257
        %v3259 = vpop.f32.mrf.mxu0
        %v3260 = vadd.f32 %v2765, %v3259
        %3261 = vmatmul.bf16.gmra.mxu0 %v3122
        %v3262 = vpop.f32.mrf.mxu0
        %v3263 = vadd.f32 %v2770, %v3262
        %v3264 = vpop.f32.mrf.mxu0
        %v3265 = vadd.f32 %v2775, %v3264
        %3266 = vmatmul.bf16.gmra.mxu0 %v3125
        %v3267 = vpop.f32.mrf.mxu0
        %v3268 = vadd.f32 %v2780, %v3267
        %v3269 = vpop.f32.mrf.mxu0
        %v3270 = vadd.f32 %v2785, %v3269
        %3271 = vmatmul.bf16.gmra.mxu0 %v3128
        %v3272 = vpop.f32.mrf.mxu0
        %v3273 = vadd.f32 %v2790, %v3272
        %v3274 = vpop.f32.mrf.mxu0
        %v3275 = vadd.f32 %v2795, %v3274
        %3276 = vmatmul.bf16.gmra.mxu0 %v3131
        %v3277 = vpop.f32.mrf.mxu0
        %v3278 = vadd.f32 %v2800, %v3277
        %v3279 = vpop.f32.mrf.mxu0
        %v3280 = vadd.f32 %v2805, %v3279
        %3281 = vmatmul.bf16.gmra.mxu0 %v3134
        %v3282 = vpop.f32.mrf.mxu0
        %v3283 = vadd.f32 %v2810, %v3282
        %v3284 = vpop.f32.mrf.mxu0
        %v3285 = vadd.f32 %v2815, %v3284
        %3286 = vmatmul.bf16.gmra.mxu0 %v3137
        %v3287 = vpop.f32.mrf.mxu0
        %v3288 = vadd.f32 %v2820, %v3287
        %v3289 = vpop.f32.mrf.mxu0
        %v3290 = vadd.f32 %v2825, %v3289
        %3291 = vmatmul.bf16.gmra.mxu0 %v3140
        %v3292 = vpop.f32.mrf.mxu0
        %v3293 = vadd.f32 %v2830, %v3292
        %v3294 = vpop.f32.mrf.mxu0
        %v3295 = vadd.f32 %v2835, %v3294
        %3296 = vmatmul.bf16.gmra.mxu0 %v3143
        %v3297 = vpop.f32.mrf.mxu0
        %v3298 = vadd.f32 %v2840, %v3297
        %v3299 = vpop.f32.mrf.mxu0
        %v3300 = vadd.f32 %v2845, %v3299
        %3301 = vmatmul.bf16.gmra.mxu0 %v3146
        %v3302 = vpop.f32.mrf.mxu0
        %v3303 = vadd.f32 %v2850, %v3302
        %v3304 = vpop.f32.mrf.mxu0
        %v3305 = vadd.f32 %v2855, %v3304
        %3306 = vmatmul.bf16.gmra.mxu0 %v3149
        %v3307 = vpop.f32.mrf.mxu0
        %v3308 = vadd.f32 %v2860, %v3307
        %v3309 = vpop.f32.mrf.mxu0
        %v3310 = vadd.f32 %v2865, %v3309
        %3311 = vmatmul.bf16.gmra.mxu0 %v3152
        %v3312 = vpop.f32.mrf.mxu0
        %v3313 = vadd.f32 %v2870, %v3312
        %v3314 = vpop.f32.mrf.mxu0
        %v3315 = vadd.f32 %v2875, %v3314
        %3316 = vmatmul.bf16.gmra.mxu0 %v3155
        %v3317 = vpop.f32.mrf.mxu0
        %v3318 = vadd.f32 %v2880, %v3317
        %v3319 = vpop.f32.mrf.mxu0
        %v3320 = vadd.f32 %v2885, %v3319
        %3321 = vmatmul.bf16.gmra.mxu0 %v3158
        %v3322 = vpop.f32.mrf.mxu0
        %v3323 = vadd.f32 %v2890, %v3322
        %v3324 = vpop.f32.mrf.mxu0
        %v3325 = vadd.f32 %v2895, %v3324
        %3326 = vmatmul.bf16.gmra.mxu0 %v3161
        %v3327 = vpop.f32.mrf.mxu0
        %v3328 = vadd.f32 %v2900, %v3327
        %v3329 = vpop.f32.mrf.mxu0
        %v3330 = vadd.f32 %v2905, %v3329
        %3331 = vdwg.mxu0
        %v3332 = vmax.f32 %v3173, 0.0
        %v3333 = vmax.f32 %v3175, 0.0
        %v3334 = vmax.f32 %v3178, 0.0
        %v3335 = vmax.f32 %v3180, 0.0
        %v3336 = vmax.f32 %v3183, 0.0
        %v3337 = vmax.f32 %v3185, 0.0
        %v3338 = vmax.f32 %v3188, 0.0
        %v3339 = vmax.f32 %v3190, 0.0
        %v3340 = vmax.f32 %v3193, 0.0
        %v3341 = vmax.f32 %v3195, 0.0
        %v3342 = vmax.f32 %v3198, 0.0
        %v3343 = vmax.f32 %v3200, 0.0
        %v3344 = vmax.f32 %v3203, 0.0
        %v3345 = vmax.f32 %v3205, 0.0
        %v3346 = vmax.f32 %v3208, 0.0
        %v3347 = vmax.f32 %v3210, 0.0
        %v3348 = vmax.f32 %v3213, 0.0
        %v3349 = vmax.f32 %v3215, 0.0
        %v3350 = vmax.f32 %v3218, 0.0
        %v3351 = vmax.f32 %v3220, 0.0
        %v3352 = vmax.f32 %v3223, 0.0
        %v3353 = vmax.f32 %v3225, 0.0
        %v3354 = vmax.f32 %v3228, 0.0
        %v3355 = vmax.f32 %v3230, 0.0
        %v3356 = vmax.f32 %v3233, 0.0
        %v3357 = vmax.f32 %v3235, 0.0
        %v3358 = vmax.f32 %v3238, 0.0
        %v3359 = vmax.f32 %v3240, 0.0
        %v3360 = vmax.f32 %v3243, 0.0
        %v3361 = vmax.f32 %v3245, 0.0
        %v3362 = vmax.f32 %v3248, 0.0
        %v3363 = vmax.f32 %v3250, 0.0
        %v3364 = vmax.f32 %v3253, 0.0
        %v3365 = vmax.f32 %v3255, 0.0
        %v3366 = vmax.f32 %v3258, 0.0
        %v3367 = vmax.f32 %v3260, 0.0
        %v3368 = vmax.f32 %v3263, 0.0
        %v3369 = vmax.f32 %v3265, 0.0
        %v3370 = vmax.f32 %v3268, 0.0
        %v3371 = vmax.f32 %v3270, 0.0
        %v3372 = vmax.f32 %v3273, 0.0
        %v3373 = vmax.f32 %v3275, 0.0
        %v3374 = vmax.f32 %v3278, 0.0
        %v3375 = vmax.f32 %v3280, 0.0
        %v3376 = vmax.f32 %v3283, 0.0
        %v3377 = vmax.f32 %v3285, 0.0
        %v3378 = vmax.f32 %v3288, 0.0
        %v3379 = vmax.f32 %v3290, 0.0
        %v3380 = vmax.f32 %v3293, 0.0
        %v3381 = vmax.f32 %v3295, 0.0
        %v3382 = vmax.f32 %v3298, 0.0
        %v3383 = vmax.f32 %v3300, 0.0
        %v3384 = vmax.f32 %v3303, 0.0
        %v3385 = vmax.f32 %v3305, 0.0
        %v3386 = vmax.f32 %v3308, 0.0
        %v3387 = vmax.f32 %v3310, 0.0
        %v3388 = vmax.f32 %v3313, 0.0
        %v3389 = vmax.f32 %v3315, 0.0
        %v3390 = vmax.f32 %v3318, 0.0
        %v3391 = vmax.f32 %v3320, 0.0
        %v3392 = vmax.f32 %v3323, 0.0
        %v3393 = vmax.f32 %v3325, 0.0
        %v3394 = vmax.f32 %v3328, 0.0
        %v3395 = vmax.f32 %v3330, 0.0
        %v3396 = vpack.c.bf16 %v3333, %v3332
        %v3397 = vpack.c.bf16 %v3335, %v3334
        %v3398 = vpack.c.bf16 %v3337, %v3336
        %v3399 = vpack.c.bf16 %v3339, %v3338
        %v3400 = vpack.c.bf16 %v3341, %v3340
        %v3401 = vpack.c.bf16 %v3343, %v3342
        %v3402 = vpack.c.bf16 %v3345, %v3344
        %v3403 = vpack.c.bf16 %v3347, %v3346
        %v3404 = vpack.c.bf16 %v3349, %v3348
        %v3405 = vpack.c.bf16 %v3351, %v3350
        %v3406 = vpack.c.bf16 %v3353, %v3352
        %v3407 = vpack.c.bf16 %v3355, %v3354
        %v3408 = vpack.c.bf16 %v3357, %v3356
        %v3409 = vpack.c.bf16 %v3359, %v3358
        %v3410 = vpack.c.bf16 %v3361, %v3360
        %v3411 = vpack.c.bf16 %v3363, %v3362
        %v3412 = vpack.c.bf16 %v3365, %v3364
        %v3413 = vpack.c.bf16 %v3367, %v3366
        %v3414 = vpack.c.bf16 %v3369, %v3368
        %v3415 = vpack.c.bf16 %v3371, %v3370
        %v3416 = vpack.c.bf16 %v3373, %v3372
        %v3417 = vpack.c.bf16 %v3375, %v3374
        %v3418 = vpack.c.bf16 %v3377, %v3376
        %v3419 = vpack.c.bf16 %v3379, %v3378
        %v3420 = vpack.c.bf16 %v3381, %v3380
        %v3421 = vpack.c.bf16 %v3383, %v3382
        %v3422 = vpack.c.bf16 %v3385, %v3384
        %v3423 = vpack.c.bf16 %v3387, %v3386
        %v3424 = vpack.c.bf16 %v3389, %v3388
        %v3425 = vpack.c.bf16 %v3391, %v3390
        %v3426 = vpack.c.bf16 %v3393, %v3392
        %v3427 = vpack.c.bf16 %v3395, %v3394
        %v3428 = vld [vmem:[%s6] sm:$0xff]
        %v3429 = vld [vmem:[%s6 + $0x8] sm:$0xff]
        %v3430 = vld [vmem:[%s12] sm:$0xff]
        %3432 = vset.pattern.permute.xlu0 0
        %3433 = vperm.xlu0 %3432, %v3430
        %v3434 = vpop.permute.xlu0 %3433
        %v3438 = vunpack.c.l.b16 %v3428
        %v3439 = vunpack.c.h.b16 %v3428
        %v3440 = vunpack.c.l.b16 %v3429
        %v3441 = vunpack.c.h.b16 %v3429
        %v3442 = vpack.c.b16 %v3438, %v3438
        %v3443 = vpack.c.b16 %v3439, %v3439
        %v3444 = vpack.c.b16 %v3440, %v3440
        %v3445 = vpack.c.b16 %v3441, %v3441
        %3450 = vmatpush.bf16.msra.mxu0 %v3403
        %3451 = vmatpush.bf16.msra.mxu0 %v3402
        %3452 = vmatpush.bf16.msra.mxu0 %v3401
        %3453 = vmatpush.bf16.msra.mxu0 %v3400
        %3454 = vmatpush.bf16.msra.mxu0 %v3399
        %3455 = vmatpush.bf16.msra.mxu0 %v3398
        %3456 = vmatpush.bf16.msra.mxu0 %v3397
        %3457 = vmatpush.bf16.msra.mxu0 %v3396
        %3458 = vmatmul.bf16.gmra.mxu0 %v3442
        %v3459 = vpop.f32.mrf.mxu0
        %v3460 = vadd.f32 %v3434, %v3459
        %v3461 = vpop.f32.mrf.mxu0
        %3462 = vdwg.mxu0
        %3463 = vmatpush.bf16.msra.mxu0 %v3411
        %3464 = vmatpush.bf16.msra.mxu0 %v3410
        %3465 = vmatpush.bf16.msra.mxu0 %v3409
        %3466 = vmatpush.bf16.msra.mxu0 %v3408
        %3467 = vmatpush.bf16.msra.mxu0 %v3407
        %3468 = vmatpush.bf16.msra.mxu0 %v3406
        %3469 = vmatpush.bf16.msra.mxu0 %v3405
        %3470 = vmatpush.bf16.msra.mxu0 %v3404
        %3471 = vmatmul.bf16.gmra.mxu0 %v3443
        %v3472 = vpop.f32.mrf.mxu0
        %v3473 = vadd.f32 %v3460, %v3472
        %v3474 = vpop.f32.mrf.mxu0
        %3475 = vdwg.mxu0
        %3476 = vmatpush.bf16.msra.mxu0 %v3419
        %3477 = vmatpush.bf16.msra.mxu0 %v3418
        %3478 = vmatpush.bf16.msra.mxu0 %v3417
        %3479 = vmatpush.bf16.msra.mxu0 %v3416
        %3480 = vmatpush.bf16.msra.mxu0 %v3415
        %3481 = vmatpush.bf16.msra.mxu0 %v3414
        %3482 = vmatpush.bf16.msra.mxu0 %v3413
        %3483 = vmatpush.bf16.msra.mxu0 %v3412
        %3484 = vmatmul.bf16.gmra.mxu0 %v3444
        %v3485 = vpop.f32.mrf.mxu0
        %v3486 = vadd.f32 %v3473, %v3485
        %v3487 = vpop.f32.mrf.mxu0
        %3488 = vdwg.mxu0
        %3489 = vmatpush.bf16.msra.mxu0 %v3427
        %3490 = vmatpush.bf16.msra.mxu0 %v3426
        %3491 = vmatpush.bf16.msra.mxu0 %v3425
        %3492 = vmatpush.bf16.msra.mxu0 %v3424
        %3493 = vmatpush.bf16.msra.mxu0 %v3423
        %3494 = vmatpush.bf16.msra.mxu0 %v3422
        %3495 = vmatpush.bf16.msra.mxu0 %v3421
        %3496 = vmatpush.bf16.msra.mxu0 %v3420
        %3497 = vmatmul.bf16.gmra.mxu0 %v3445
        %v3498 = vpop.f32.mrf.mxu0
        %v3499 = vadd.f32 %v3486, %v3498
        %v3500 = vpop.f32.mrf.mxu0
        %3501 = vdwg.mxu0
        %v3502 = vtanh.pop %v3499
        %3503 = vst [vmem:[%s509] sm:$0xff] %v3502
        %p3504 = scmp.lt.s32.totalorder %s24, 2
        %s3505 = scalar_select %p3504, %s24, 2
        %s3506 = smul.addr %s3505, 8
        %s3507 = scalar_lea.vmem %s13, %s3506
        // Predicated region
        $region114: #{val_net_forward.1} parent=108 // pred_check
          %p3508 = pneg %p320
        $region115: #{val_net_forward.1} parent=108 // pred_check_branch
          %3510 = sbr.rel (%p3508) target = $region117
        $region116: #{val_net_forward.1} parent=108 // pred_region
          _
        $region117: #{val_net_forward.1} parent=108 // pred_fallthru
          _
      $region109: #{val_net_forward.1} parent=5 // pred_fallthru
        _
      %p3511 = scmp.le.s32.totalorder 2, %s19
      // Predicated region
      $region118: #{val_net_forward.1} parent=5 // pred_check
        %p3512 = pneg %p3511
      $region119: #{val_net_forward.1} parent=5 // pred_check_branch
        %3514 = sbr.rel (%p3512) target = $region121
      $region120: #{val_net_forward.1} parent=5 // pred_region
        %s3515 = ssub.s32 %s19, 2
        // Predicated region
        $region122: #{val_net_forward.1} parent=120 // pred_check
          %p3516 = pneg %p326
        $region123: #{val_net_forward.1} parent=120 // pred_check_branch
          %3518 = sbr.rel (%p3516) target = $region125
        $region124: #{val_net_forward.1} parent=120 // pred_region
          %p3519 = scmp.lt.s32.totalorder %s25, 2
          %s3520 = scalar_select %p3519, %s25, 2
          %s3521 = smul.addr %s3520, 8
          %s3522 = scalar_lea.vmem %s13, %s3521
        $region125: #{val_net_forward.1} parent=120 // pred_fallthru
          _
      $region121: #{val_net_forward.1} parent=5 // pred_fallthru
        _
    $region6: #{val_net_forward.1} parent=1 // loop_footer
      %s23 = sadd.s32 1, %s19
    $region7: #{val_net_forward.1} parent=1 // loop_footer_branch
      %18 = sbr.rel target = $region3
    $region8: #{val_net_forward.1} parent=1 // loop_exit
      _

</llo_original>
